<compile_context>
chip_gen: v7x
topology: tpu7x:2x2x1
jax: 0.10.0
libtpu: 0.0.40
codegen_flags: <defaults>
</compile_context>

<pallas_src>
import functools

import jax
import jax.numpy as jnp
from jax import lax
from jax.experimental import pallas as pl
from jax.experimental.pallas import tpu as pltpu


def _round_up(x, m):
    return (x + m - 1) // m * m


def _pick_k_tile(k_pad, max_tile=1024):
    """Largest multiple of 128 that divides k_pad, capped at max_tile."""
    best = 128
    d = 128
    while d <= min(k_pad, max_tile):
        if k_pad % d == 0:
            best = d
        d += 128
    return best


# ----------------------------------------------------------------------------
# Kernel 1: conv-as-matmul over the 4 pool quadrants + max-pool + bias + ReLU.
# Gate gc1 is already folded into wc/bc by the wrapper.  bf16 in, bf16 out,
# f32 accumulate.
# ----------------------------------------------------------------------------
def conv_pool_kernel(p_ref, wc_ref, bc_ref, out_ref):
    # p_ref : (4, TM, K)  quadrant im2col patch tiles (bf16)
    # wc_ref: (K, Cout)   gate-folded conv weight (bf16, resident)
    # bc_ref: (1, Cout)   gate-folded conv bias (f32, resident)
    # out   : (TM, Cout)  pooled, ReLU'd conv activations (bf16)
    w = wc_ref[...]
    h = jnp.dot(p_ref[0], w, preferred_element_type=jnp.float32)
    h = jnp.maximum(h, jnp.dot(p_ref[1], w, preferred_element_type=jnp.float32))
    h = jnp.maximum(h, jnp.dot(p_ref[2], w, preferred_element_type=jnp.float32))
    h = jnp.maximum(h, jnp.dot(p_ref[3], w, preferred_element_type=jnp.float32))
    # max-pool == elementwise max over the 4 quadrants; bias/ReLU commute.
    out_ref[...] = jnp.maximum(h + bc_ref[...], 0.0).astype(out_ref.dtype)


def conv_pool(qpatches, wc_mat, bc_row, *, tm):
    _, m_pad, kdim = qpatches.shape
    cout = wc_mat.shape[1]
    flops = 2 * 4 * m_pad * kdim * cout
    bytes_accessed = (qpatches.size * 2 + wc_mat.size * 2 + bc_row.size * 4
                      + m_pad * cout * 2)
    return pl.pallas_call(
        conv_pool_kernel,
        out_shape=jax.ShapeDtypeStruct((m_pad, cout), jnp.bfloat16),
        grid_spec=pltpu.PrefetchScalarGridSpec(
            num_scalar_prefetch=0,
            grid=(m_pad // tm,),
            in_specs=[
                pl.BlockSpec((4, tm, kdim), lambda i: (0, i, 0)),
                pl.BlockSpec((kdim, cout), lambda i: (0, 0)),   # resident weight
                pl.BlockSpec((1, cout), lambda i: (0, 0)),      # resident bias
            ],
            out_specs=pl.BlockSpec((tm, cout), lambda i: (i, 0)),
        ),
        compiler_params=pltpu.CompilerParams(
            dimension_semantics=("parallel",)),
        cost_estimate=pl.CostEstimate(flops=flops, transcendentals=0,
                                      bytes_accessed=bytes_accessed),
    )(qpatches, wc_mat, bc_row)


# ----------------------------------------------------------------------------
# Kernel 2: fused MLP  fc1 (K-tiled reduction) -> relu -> fc2 -> relu ->
# all task heads (concatenated).  Gates gfc1/gfc2 are folded into w1/b1,w2/b2.
# grid = (batch tiles [parallel], fc1-K tiles [arbitrary]).
# ----------------------------------------------------------------------------
def mlp_kernel(h_ref, w1_ref, b1_ref, w2_ref, b2_ref, wl_ref, bl_ref,
               out_ref, acc_ref):
    k = pl.program_id(1)

    @pl.when(k == 0)
    def _():
        acc_ref[...] = jnp.zeros_like(acc_ref)

    acc_ref[...] += jnp.dot(h_ref[...], w1_ref[...],
                            preferred_element_type=jnp.float32)

    @pl.when(k == pl.num_programs(1) - 1)
    def _():
        h1 = jnp.maximum(acc_ref[...] + b1_ref[...], 0.0).astype(jnp.bfloat16)
        h2 = jnp.dot(h1, w2_ref[...], preferred_element_type=jnp.float32)
        h2 = jnp.maximum(h2 + b2_ref[...], 0.0).astype(jnp.bfloat16)
        y = jnp.dot(h2, wl_ref[...], preferred_element_type=jnp.float32)
        out_ref[...] = (y + bl_ref[...]).astype(out_ref.dtype)


def mlp_heads(h_flat, w1, b1, w2, b2, wl, bl, *, tb, tk):
    b_pad, k_pad = h_flat.shape
    nhid_pad = w1.shape[1]
    ncls_pad = wl.shape[1]
    nb, nk = b_pad // tb, k_pad // tk
    flops = 2 * b_pad * (k_pad * nhid_pad + nhid_pad * nhid_pad
                         + nhid_pad * ncls_pad)
    bytes_accessed = (h_flat.size * 2 + w1.size * 2 + w2.size * 2 + wl.size * 2
                      + (b1.size + b2.size + bl.size) * 4
                      + b_pad * ncls_pad * 4)
    return pl.pallas_call(
        mlp_kernel,
        out_shape=jax.ShapeDtypeStruct((b_pad, ncls_pad), jnp.float32),
        grid_spec=pltpu.PrefetchScalarGridSpec(
            num_scalar_prefetch=0,
            grid=(nb, nk),
            in_specs=[
                pl.BlockSpec((tb, tk), lambda b, k: (b, k)),           # acts
                pl.BlockSpec((tk, nhid_pad), lambda b, k: (k, 0)),     # fc1 K-tile
                pl.BlockSpec((1, nhid_pad), lambda b, k: (0, 0)),      # resident
                pl.BlockSpec((nhid_pad, nhid_pad), lambda b, k: (0, 0)),
                pl.BlockSpec((1, nhid_pad), lambda b, k: (0, 0)),
                pl.BlockSpec((nhid_pad, ncls_pad), lambda b, k: (0, 0)),
                pl.BlockSpec((1, ncls_pad), lambda b, k: (0, 0)),
            ],
            out_specs=pl.BlockSpec((tb, ncls_pad), lambda b, k: (b, 0)),
            scratch_shapes=[pltpu.VMEM((tb, nhid_pad), jnp.float32)],
        ),
        compiler_params=pltpu.CompilerParams(
            dimension_semantics=("parallel", "arbitrary"),
            vmem_limit_bytes=32 * 1024 * 1024),
        cost_estimate=pl.CostEstimate(flops=flops, transcendentals=0,
                                      bytes_accessed=bytes_accessed),
    )(h_flat, w1, b1, w2, b2, wl, bl)


# ----------------------------------------------------------------------------
# Full model wrapper (glue: gate folding, quadrant im2col, padding, splitting).
# ----------------------------------------------------------------------------
def hat_forward(params, t, x, s_gate=1.0, *, taskcla):
    B, C, H, W = x.shape
    Cout, _, k, _ = params["wc"].shape
    Ho, Wo = H - k + 1, W - k + 1
    Ph, Pw = Ho // 2, Wo // 2            # floor pooling drops odd row/col
    S = Ph * Pw
    Kdim = C * k * k
    nhid = params["w1"].shape[1]
    total_cls = params["wl"].shape[1]

    # Static padded / tile sizes.
    M = B * S
    tm = min(_round_up(M, 8), 256)
    M_pad = _round_up(M, tm)
    tb = min(_round_up(B, 8), 128)
    B_pad = _round_up(B, tb)
    Kfc1 = S * Cout
    K_pad = _round_up(Kfc1, 128)
    tk = _pick_k_tile(K_pad, max_tile=1024)
    nhid_pad = _round_up(nhid, 128)
    ncls_pad = _round_up(total_cls, 128)

    f32, bf16 = jnp.float32, jnp.bfloat16

    # HAT masks (embedding lookup + sigmoid) -- tiny, plain JAX.
    gc1 = jax.nn.sigmoid(s_gate * params["ec1"][t])      # (Cout,)
    gfc1 = jax.nn.sigmoid(s_gate * params["efc1"][t])    # (nhid,)
    gfc2 = jax.nn.sigmoid(s_gate * params["efc2"][t])    # (nhid,)

    # Fold gates into weights/biases (positive scale commutes with ReLU and
    # max-pool), cast weights to bf16, zero-pad to lane-dense shapes.
    wc_g = params["wc"] * gc1[:, None, None, None]
    wc_mat = wc_g.reshape(Cout, Kdim).T.astype(bf16)               # (Kdim, Cout)
    bc_g = (params["bc"] * gc1).reshape(1, Cout).astype(f32)

    # fc1 rows permuted from PyTorch's channel-major flatten (c*S + s) to the
    # spatial-major order (s*Cout + c) emitted by the conv kernel.
    w1_g = (params["w1"].reshape(Cout, S, nhid).transpose(1, 0, 2)
            .reshape(Kfc1, nhid)) * gfc1[None, :]
    w1_g = jnp.pad(w1_g, ((0, K_pad - Kfc1), (0, nhid_pad - nhid))).astype(bf16)
    b1_g = jnp.pad((params["b1"] * gfc1).reshape(1, nhid),
                   ((0, 0), (0, nhid_pad - nhid))).astype(f32)
    w2_g = jnp.pad(params["w2"] * gfc2[None, :],
                   ((0, nhid_pad - nhid), (0, nhid_pad - nhid))).astype(bf16)
    b2_g = jnp.pad((params["b2"] * gfc2).reshape(1, nhid),
                   ((0, 0), (0, nhid_pad - nhid))).astype(f32)
    wl_p = jnp.pad(params["wl"], ((0, nhid_pad - nhid),
                                  (0, ncls_pad - total_cls))).astype(bf16)
    bl_p = jnp.pad(params["bl"].reshape(1, total_cls),
                   ((0, 0), (0, ncls_pad - total_cls))).astype(f32)

    # im2col with channel-major patch columns (c, kh, kw) to match OIHW flatten.
    cols = []
    for c in range(C):
        for i in range(k):
            for j in range(k):
                cols.append(x[:, c, i:i + Ho, j:j + Wo])
    patches = jnp.stack(cols, axis=-1)                   # (B, Ho, Wo, Kdim)

    # One patch set per 2x2 pool offset, restricted to pooled output positions.
    quads = [patches[:, dy:2 * Ph:2, dx:2 * Pw:2, :].reshape(M, Kdim)
             for dy in range(2) for dx in range(2)]
    qpatches = jnp.stack(quads, axis=0)                  # (4, M, Kdim)
    qpatches = jnp.pad(qpatches, ((0, 0), (0, M_pad - M), (0, 0))).astype(bf16)

    pooled = conv_pool(qpatches, wc_mat, bc_g, tm=tm)    # (M_pad, Cout) bf16

    # Contiguous reshape: row b covers rows [b*S, (b+1)*S) of pooled,
    # flattened spatial-major then channel -- matches w1_g's row order.
    h_flat = pooled[:M].reshape(B, Kfc1)                 # (B, 3136) bf16
    h_flat = jnp.pad(h_flat, ((0, B_pad - B), (0, K_pad - Kfc1)))

    y_all = mlp_heads(h_flat, w1_g, b1_g, w2_g, b2_g, wl_p, bl_p,
                      tb=tb, tk=tk)                      # (B_pad, ncls_pad)
    y_all = y_all[:B, :total_cls]

    # Split fused heads back into the per-task list.
    y, off = [], 0
    for _, n in taskcla:
        y.append(y_all[:, off:off + n])
        off += n
    return y, [gc1, gfc1, gfc2]


# ----------------------------------------------------------------------------
# Pure-JAX f32 reference (un-folded gates) for a numerical sanity check.
# ----------------------------------------------------------------------------
def ref_forward(params, t, x, s_gate=1.0):
    gc1 = jax.nn.sigmoid(s_gate * params["ec1"][t])
    gfc1 = jax.nn.sigmoid(s_gate * params["efc1"][t])
    gfc2 = jax.nn.sigmoid(s_gate * params["efc2"][t])
    h = lax.conv_general_dilated(
        x, params["wc"], (1, 1), "VALID",
        dimension_numbers=("NCHW", "OIHW", "NCHW"))
    h = jnp.maximum(h + params["bc"][None, :, None, None], 0.0)
    h = lax.reduce_window(h, -jnp.inf, lax.max, (1, 1, 2, 2), (1, 1, 2, 2), "VALID")
    h = h * gc1[None, :, None, None]
    h = h.reshape(x.shape[0], -1)
    h = jnp.maximum(h @ params["w1"] + params["b1"], 0.0) * gfc1
    h = jnp.maximum(h @ params["w2"] + params["b2"], 0.0) * gfc2
    return h @ params["wl"] + params["bl"]


if __name__ == "__main__":
    # Small, module-consistent shapes.
    B, C, SIZE = 2, 4, 16
    NHID = 32
    TASKCLA = [(0, 5), (1, 5)]
    T = len(TASKCLA)
    CONV_OUT = 64
    K = SIZE // 8                       # kernel_size = 2
    SMID = (SIZE - K + 1) // 2          # 7
    FC1_IN = CONV_OUT * SMID * SMID     # 3136
    TOTAL_CLS = sum(n for _, n in TASKCLA)

    key = jax.random.PRNGKey(0)
    ks = jax.random.split(key, 12)
    params = {
        "wc":  0.1 * jax.random.normal(ks[0], (CONV_OUT, C, K, K), jnp.float32),
        "bc":  0.1 * jax.random.normal(ks[1], (CONV_OUT,), jnp.float32),
        "w1":  0.05 * jax.random.normal(ks[2], (FC1_IN, NHID), jnp.float32),
        "b1":  0.05 * jax.random.normal(ks[3], (NHID,), jnp.float32),
        "w2":  0.1 * jax.random.normal(ks[4], (NHID, NHID), jnp.float32),
        "b2":  0.1 * jax.random.normal(ks[5], (NHID,), jnp.float32),
        "wl":  0.1 * jax.random.normal(ks[6], (NHID, TOTAL_CLS), jnp.float32),
        "bl":  0.1 * jax.random.normal(ks[7], (TOTAL_CLS,), jnp.float32),
        "ec1": jax.random.normal(ks[8], (T, CONV_OUT), jnp.float32),
        "efc1": jax.random.normal(ks[9], (T, NHID), jnp.float32),
        "efc2": jax.random.normal(ks[10], (T, NHID), jnp.float32),
    }
    x = jax.random.normal(ks[11], (B, C, SIZE, SIZE), jnp.float32)
    t = 1
    s_gate = 1.0

    fwd = jax.jit(functools.partial(hat_forward, taskcla=TASKCLA))
    y, masks = fwd(params, t, x, s_gate)
    y = [jax.block_until_ready(yi) for yi in y]
    masks = [jax.block_until_ready(m) for m in masks]

    # Sanity check against the pure-JAX f32 reference (tolerance relaxed for
    # the bf16 MXU operands).
    y_ref = ref_forward(params, t, x, s_gate)
    y_cat = jnp.concatenate(y, axis=1)
    assert y_cat.shape == (B, TOTAL_CLS)
    assert masks[0].shape == (CONV_OUT,) and masks[1].shape == (NHID,)
    if not jnp.allclose(y_cat, y_ref, rtol=3e-2, atol=3e-2):
        raise AssertionError("Pallas output mismatch vs JAX reference")

    print("KERNEL_OK")
</pallas_src>

<mosaic_0001>
module attributes {stable_mosaic.version = 11 : i64} {
  func.func @conv_pool_kernel(%arg0: i32, %arg1: memref<4x104x16xbf16, #tpu.memory_space<vmem>>, %arg2: memref<16x64xbf16, #tpu.memory_space<vmem>>, %arg3: memref<1x64xf32, #tpu.memory_space<vmem>>, %arg4: memref<104x64xbf16, #tpu.memory_space<vmem>>) attributes {dimension_semantics = [#tpu.dimension_semantics<parallel>], iteration_bounds = array<i64: 1>, scalar_prefetch = 0 : i64, scratch_operands = 0 : i64, tpu.core_type = #tpu.core_type<tc>, window_params = [{transform_indices = @transform_0, window_bounds = array<i64: 4, 104, 16>}, {pipeline_mode = #tpu.pipeline_mode<synchronous>, transform_indices = @transform_1, window_bounds = array<i64: 16, 64>}, {pipeline_mode = #tpu.pipeline_mode<synchronous>, transform_indices = @transform_2, window_bounds = array<i64: 1, 64>}, {transform_indices = @transform_3, window_bounds = array<i64: 104, 64>}]} {
    %c0 = arith.constant 0 : index
    %c0_0 = arith.constant 0 : index
    %0 = vector.load %arg2[%c0, %c0_0] : memref<16x64xbf16, #tpu.memory_space<vmem>>, vector<16x64xbf16>
    %c0_1 = arith.constant 0 : index
    %c0_2 = arith.constant 0 : index
    %c0_3 = arith.constant 0 : index
    %1 = vector.load %arg1[%c0_1, %c0_2, %c0_3] : memref<4x104x16xbf16, #tpu.memory_space<vmem>>, vector<1x104x16xbf16>
    %2 = vector.shape_cast %1 : vector<1x104x16xbf16> to vector<104x16xbf16>
    %cst = arith.constant dense<0.000000e+00> : vector<104x64xf32>
    %3 = tpu.matmul %2, %0, %cst {dimension_numbers = #tpu.dot_dimension_numbers<[1], [0], [0], [1], [0, 0, 1, 1], [], []>} : vector<104x16xbf16>, vector<16x64xbf16>, vector<104x64xf32> -> vector<104x64xf32>
    %c1 = arith.constant 1 : index
    %c0_4 = arith.constant 0 : index
    %c0_5 = arith.constant 0 : index
    %4 = vector.load %arg1[%c1, %c0_4, %c0_5] : memref<4x104x16xbf16, #tpu.memory_space<vmem>>, vector<1x104x16xbf16>
    %5 = vector.shape_cast %4 : vector<1x104x16xbf16> to vector<104x16xbf16>
    %cst_6 = arith.constant dense<0.000000e+00> : vector<104x64xf32>
    %6 = tpu.matmul %5, %0, %cst_6 {dimension_numbers = #tpu.dot_dimension_numbers<[1], [0], [0], [1], [0, 0, 1, 1], [], []>} : vector<104x16xbf16>, vector<16x64xbf16>, vector<104x64xf32> -> vector<104x64xf32>
    %7 = arith.maximumf %3, %6 : vector<104x64xf32>
    %c2 = arith.constant 2 : index
    %c0_7 = arith.constant 0 : index
    %c0_8 = arith.constant 0 : index
    %8 = vector.load %arg1[%c2, %c0_7, %c0_8] : memref<4x104x16xbf16, #tpu.memory_space<vmem>>, vector<1x104x16xbf16>
    %9 = vector.shape_cast %8 : vector<1x104x16xbf16> to vector<104x16xbf16>
    %cst_9 = arith.constant dense<0.000000e+00> : vector<104x64xf32>
    %10 = tpu.matmul %9, %0, %cst_9 {dimension_numbers = #tpu.dot_dimension_numbers<[1], [0], [0], [1], [0, 0, 1, 1], [], []>} : vector<104x16xbf16>, vector<16x64xbf16>, vector<104x64xf32> -> vector<104x64xf32>
    %11 = arith.maximumf %7, %10 : vector<104x64xf32>
    %c3 = arith.constant 3 : index
    %c0_10 = arith.constant 0 : index
    %c0_11 = arith.constant 0 : index
    %12 = vector.load %arg1[%c3, %c0_10, %c0_11] : memref<4x104x16xbf16, #tpu.memory_space<vmem>>, vector<1x104x16xbf16>
    %13 = vector.shape_cast %12 : vector<1x104x16xbf16> to vector<104x16xbf16>
    %cst_12 = arith.constant dense<0.000000e+00> : vector<104x64xf32>
    %14 = tpu.matmul %13, %0, %cst_12 {dimension_numbers = #tpu.dot_dimension_numbers<[1], [0], [0], [1], [0, 0, 1, 1], [], []>} : vector<104x16xbf16>, vector<16x64xbf16>, vector<104x64xf32> -> vector<104x64xf32>
    %15 = arith.maximumf %11, %14 : vector<104x64xf32>
    %c0_13 = arith.constant 0 : index
    %c0_14 = arith.constant 0 : index
    %16 = vector.load %arg3[%c0_13, %c0_14] : memref<1x64xf32, #tpu.memory_space<vmem>>, vector<1x64xf32>
    %17 = vector.broadcast %16 : vector<1x64xf32> to vector<104x64xf32>
    %18 = arith.addf %15, %17 : vector<104x64xf32>
    %cst_15 = arith.constant 0.000000e+00 : f32
    %19 = vector.broadcast %cst_15 : f32 to vector<104x64xf32>
    %20 = arith.maximumf %18, %19 : vector<104x64xf32>
    %21 = arith.truncf %20 : vector<104x64xf32> to vector<104x64xbf16>
    %c0_16 = arith.constant 0 : index
    %c0_17 = arith.constant 0 : index
    %22 = vector.load %arg4[%c0_16, %c0_17] : memref<104x64xbf16, #tpu.memory_space<vmem>>, vector<104x64xbf16>
    tpu.vector_store %arg4[%c0_16, %c0_17], %21 {strides = array<i32>} : memref<104x64xbf16, #tpu.memory_space<vmem>>, vector<104x64xbf16>,
    return
  }
  func.func @transform_0(%arg0: i32) -> (i32, i32, i32) {
    %c0_i32 = arith.constant 0 : i32
    %c0_i32_0 = arith.constant 0 : i32
    %c0_i32_1 = arith.constant 0 : i32
    return %c0_i32, %arg0, %c0_i32_0 : i32, i32, i32
  }
  func.func @transform_1(%arg0: i32) -> (i32, i32) {
    %c0_i32 = arith.constant 0 : i32
    %c0_i32_0 = arith.constant 0 : i32
    %c0_i32_1 = arith.constant 0 : i32
    return %c0_i32, %c0_i32_0 : i32, i32
  }
  func.func @transform_2(%arg0: i32) -> (i32, i32) {
    %c0_i32 = arith.constant 0 : i32
    %c0_i32_0 = arith.constant 0 : i32
    %c0_i32_1 = arith.constant 0 : i32
    return %c0_i32, %c0_i32_0 : i32, i32
  }
  func.func @transform_3(%arg0: i32) -> (i32, i32) {
    %c0_i32 = arith.constant 0 : i32
    %c0_i32_0 = arith.constant 0 : i32
    return %arg0, %c0_i32 : i32, i32
  }
}

module attributes {stable_mosaic.version = 11 : i64} {
  func.func @mlp_kernel(%arg0: i32, %arg1: i32, %arg2: memref<8x640xbf16, #tpu.memory_space<vmem>>, %arg3: memref<640x128xbf16, #tpu.memory_space<vmem>>, %arg4: memref<1x128xf32, #tpu.memory_space<vmem>>, %arg5: memref<128x128xbf16, #tpu.memory_space<vmem>>, %arg6: memref<1x128xf32, #tpu.memory_space<vmem>>, %arg7: memref<128x128xbf16, #tpu.memory_space<vmem>>, %arg8: memref<1x128xf32, #tpu.memory_space<vmem>>, %arg9: memref<8x128xf32, #tpu.memory_space<vmem>>, %arg10: memref<8x128xf32, #tpu.memory_space<vmem>>) attributes {dimension_semantics = [#tpu.dimension_semantics<parallel>, #tpu.dimension_semantics<arbitrary>], iteration_bounds = array<i64: 1, 5>, scalar_prefetch = 0 : i64, scratch_operands = 1 : i64, tpu.core_type = #tpu.core_type<tc>, window_params = [{transform_indices = @transform_0, window_bounds = array<i64: 8, 640>}, {transform_indices = @transform_1, window_bounds = array<i64: 640, 128>}, {pipeline_mode = #tpu.pipeline_mode<synchronous>, transform_indices = @transform_2, window_bounds = array<i64: 1, 128>}, {pipeline_mode = #tpu.pipeline_mode<synchronous>, transform_indices = @transform_3, window_bounds = array<i64: 128, 128>}, {pipeline_mode = #tpu.pipeline_mode<synchronous>, transform_indices = @transform_4, window_bounds = array<i64: 1, 128>}, {pipeline_mode = #tpu.pipeline_mode<synchronous>, transform_indices = @transform_5, window_bounds = array<i64: 128, 128>}, {pipeline_mode = #tpu.pipeline_mode<synchronous>, transform_indices = @transform_6, window_bounds = array<i64: 1, 128>}, {transform_indices = @transform_7, window_bounds = array<i64: 8, 128>}]} {
    %c0_i32 = arith.constant 0 : i32
    %0 = arith.cmpi eq, %arg1, %c0_i32 : i32
    %1 = arith.extui %0 : i1 to i32
    %c0_i32_0 = arith.constant 0 : i32
    %2 = arith.cmpi ne, %1, %c0_i32_0 : i32
    scf.if %2 {
      %cst_9 = arith.constant 0.000000e+00 : f32
      %12 = vector.broadcast %cst_9 : f32 to vector<8x128xf32>
      %c0_10 = arith.constant 0 : index
      %c0_11 = arith.constant 0 : index
      %13 = vector.load %arg10[%c0_10, %c0_11] : memref<8x128xf32, #tpu.memory_space<vmem>>, vector<8x128xf32>
      tpu.vector_store %arg10[%c0_10, %c0_11], %12 {strides = array<i32>} : memref<8x128xf32, #tpu.memory_space<vmem>>, vector<8x128xf32>,
    } else {
    }
    %c0 = arith.constant 0 : index
    %c0_1 = arith.constant 0 : index
    %3 = vector.load %arg10[%c0, %c0_1] : memref<8x128xf32, #tpu.memory_space<vmem>>, vector<8x128xf32>
    %c0_2 = arith.constant 0 : index
    %c0_3 = arith.constant 0 : index
    %4 = vector.load %arg2[%c0_2, %c0_3] : memref<8x640xbf16, #tpu.memory_space<vmem>>, vector<8x640xbf16>
    %c0_4 = arith.constant 0 : index
    %c0_5 = arith.constant 0 : index
    %5 = vector.load %arg3[%c0_4, %c0_5] : memref<640x128xbf16, #tpu.memory_space<vmem>>, vector<640x128xbf16>
    %cst = arith.constant dense<0.000000e+00> : vector<8x128xf32>
    %6 = tpu.matmul %4, %5, %cst {dimension_numbers = #tpu.dot_dimension_numbers<[1], [0], [0], [1], [0, 0, 1, 1], [], []>} : vector<8x640xbf16>, vector<640x128xbf16>, vector<8x128xf32> -> vector<8x128xf32>
    %7 = arith.addf %3, %6 : vector<8x128xf32>
    %c0_6 = arith.constant 0 : index
    %c0_7 = arith.constant 0 : index
    %8 = vector.load %arg10[%c0_6, %c0_7] : memref<8x128xf32, #tpu.memory_space<vmem>>, vector<8x128xf32>
    tpu.vector_store %arg10[%c0_6, %c0_7], %7 {strides = array<i32>} : memref<8x128xf32, #tpu.memory_space<vmem>>, vector<8x128xf32>,
    %c4_i32 = arith.constant 4 : i32
    %9 = arith.cmpi eq, %arg1, %c4_i32 : i32
    %10 = arith.extui %9 : i1 to i32
    %c0_i32_8 = arith.constant 0 : i32
    %11 = arith.cmpi ne, %10, %c0_i32_8 : i32
    scf.if %11 {
      %c0_9 = arith.constant 0 : index
      %c0_10 = arith.constant 0 : index
      %12 = vector.load %arg10[%c0_9, %c0_10] : memref<8x128xf32, #tpu.memory_space<vmem>>, vector<8x128xf32>
      %c0_11 = arith.constant 0 : index
      %c0_12 = arith.constant 0 : index
      %13 = vector.load %arg4[%c0_11, %c0_12] : memref<1x128xf32, #tpu.memory_space<vmem>>, vector<1x128xf32>
      %14 = vector.broadcast %13 : vector<1x128xf32> to vector<8x128xf32>
      %15 = arith.addf %12, %14 : vector<8x128xf32>
      %cst_13 = arith.constant 0.000000e+00 : f32
      %16 = vector.broadcast %cst_13 : f32 to vector<8x128xf32>
      %17 = arith.maximumf %15, %16 : vector<8x128xf32>
      %18 = arith.truncf %17 : vector<8x128xf32> to vector<8x128xbf16>
      %c0_14 = arith.constant 0 : index
      %c0_15 = arith.constant 0 : index
      %19 = vector.load %arg5[%c0_14, %c0_15] : memref<128x128xbf16, #tpu.memory_space<vmem>>, vector<128x128xbf16>
      %cst_16 = arith.constant dense<0.000000e+00> : vector<8x128xf32>
      %20 = tpu.matmul %18, %19, %cst_16 {dimension_numbers = #tpu.dot_dimension_numbers<[1], [0], [0], [1], [0, 0, 1, 1], [], []>} : vector<8x128xbf16>, vector<128x128xbf16>, vector<8x128xf32> -> vector<8x128xf32>
      %c0_17 = arith.constant 0 : index
      %c0_18 = arith.constant 0 : index
      %21 = vector.load %arg6[%c0_17, %c0_18] : memref<1x128xf32, #tpu.memory_space<vmem>>, vector<1x128xf32>
      %22 = vector.broadcast %21 : vector<1x128xf32> to vector<8x128xf32>
      %23 = arith.addf %20, %22 : vector<8x128xf32>
      %cst_19 = arith.constant 0.000000e+00 : f32
      %24 = vector.broadcast %cst_19 : f32 to vector<8x128xf32>
      %25 = arith.maximumf %23, %24 : vector<8x128xf32>
      %26 = arith.truncf %25 : vector<8x128xf32> to vector<8x128xbf16>
      %c0_20 = arith.constant 0 : index
      %c0_21 = arith.constant 0 : index
      %27 = vector.load %arg7[%c0_20, %c0_21] : memref<128x128xbf16, #tpu.memory_space<vmem>>, vector<128x128xbf16>
      %cst_22 = arith.constant dense<0.000000e+00> : vector<8x128xf32>
      %28 = tpu.matmul %26, %27, %cst_22 {dimension_numbers = #tpu.dot_dimension_numbers<[1], [0], [0], [1], [0, 0, 1, 1], [], []>} : vector<8x128xbf16>, vector<128x128xbf16>, vector<8x128xf32> -> vector<8x128xf32>
      %c0_23 = arith.constant 0 : index
      %c0_24 = arith.constant 0 : index
      %29 = vector.load %arg8[%c0_23, %c0_24] : memref<1x128xf32, #tpu.memory_space<vmem>>, vector<1x128xf32>
      %30 = vector.broadcast %29 : vector<1x128xf32> to vector<8x128xf32>
      %31 = arith.addf %28, %30 : vector<8x128xf32>
      %c0_25 = arith.constant 0 : index
      %c0_26 = arith.constant 0 : index
      %32 = vector.load %arg9[%c0_25, %c0_26] : memref<8x128xf32, #tpu.memory_space<vmem>>, vector<8x128xf32>
      tpu.vector_store %arg9[%c0_25, %c0_26], %31 {strides = array<i32>} : memref<8x128xf32, #tpu.memory_space<vmem>>, vector<8x128xf32>,
    } else {
    }
    return
  }
  func.func @transform_0(%arg0: i32, %arg1: i32) -> (i32, i32) {
    %c0_i32 = arith.constant 0 : i32
    return %arg0, %arg1 : i32, i32
  }
  func.func @transform_1(%arg0: i32, %arg1: i32) -> (i32, i32) {
    %c0_i32 = arith.constant 0 : i32
    %c0_i32_0 = arith.constant 0 : i32
    return %arg1, %c0_i32 : i32, i32
  }
  func.func @transform_2(%arg0: i32, %arg1: i32) -> (i32, i32) {
    %c0_i32 = arith.constant 0 : i32
    %c0_i32_0 = arith.constant 0 : i32
    %c0_i32_1 = arith.constant 0 : i32
    return %c0_i32, %c0_i32_0 : i32, i32
  }
  func.func @transform_3(%arg0: i32, %arg1: i32) -> (i32, i32) {
    %c0_i32 = arith.constant 0 : i32
    %c0_i32_0 = arith.constant 0 : i32
    %c0_i32_1 = arith.constant 0 : i32
    return %c0_i32, %c0_i32_0 : i32, i32
  }
  func.func @transform_4(%arg0: i32, %arg1: i32) -> (i32, i32) {
    %c0_i32 = arith.constant 0 : i32
    %c0_i32_0 = arith.constant 0 : i32
    %c0_i32_1 = arith.constant 0 : i32
    return %c0_i32, %c0_i32_0 : i32, i32
  }
  func.func @transform_5(%arg0: i32, %arg1: i32) -> (i32, i32) {
    %c0_i32 = arith.constant 0 : i32
    %c0_i32_0 = arith.constant 0 : i32
    %c0_i32_1 = arith.constant 0 : i32
    return %c0_i32, %c0_i32_0 : i32, i32
  }
  func.func @transform_6(%arg0: i32, %arg1: i32) -> (i32, i32) {
    %c0_i32 = arith.constant 0 : i32
    %c0_i32_0 = arith.constant 0 : i32
    %c0_i32_1 = arith.constant 0 : i32
    return %c0_i32, %c0_i32_0 : i32, i32
  }
  func.func @transform_7(%arg0: i32, %arg1: i32) -> (i32, i32) {
    %c0_i32 = arith.constant 0 : i32
    %c0_i32_0 = arith.constant 0 : i32
    return %arg0, %c0_i32 : i32, i32
  }
}

</mosaic_0001>

<llo_original>
// kernel: hat_forward.2
$region0: #{hat_forward.2}
  #allocation0 [shape = 'u32[]', space=smem, size = 0x4, offset = 0x4, fixed_abs, tag = 'smem constant byte address 0x4 - core index']
  #allocation1 [shape = 'u32[144,128]{1,0:T(1,128)}', space=vmem, size = 0x12000, scoped, tag = 'internal scratch']
  %s0 = inlined_call_operand.vmem [shape: bf16[4,104,16], index: 0, kind: input, shape index: {}]
  %s1 = inlined_call_operand.vmem [shape: bf16[16,64], index: 1, kind: input, shape index: {}]
  %s2 = inlined_call_operand.vmem [shape: f32[1,64], index: 2, kind: input, shape index: {}]
  %s3 = inlined_call_operand.vmem [shape: bf16[104,64], index: 3, kind: output, shape index: {}]
  %s4 = sld [smem:[#allocation0]]
  $region22: #{hat_forward.2} parent=0
    _
  %s6 = ssub.s32 1, %s4
  %s7 = scalar_select 0, %s6, %s4
  // Predicated region
  $region2: #{hat_forward.2} parent=0 // pred_check
    _
  $region3: #{hat_forward.2} parent=0 // pred_check_branch
    %9 = sbr.rel (0) target = $region5
  $region4: #{hat_forward.2} parent=0 // pred_region
    _
  $region5: #{hat_forward.2} parent=0 // pred_fallthru
    _
  // Predicated region
  $region6: #{hat_forward.2} parent=0 // pred_check
    _
  $region7: #{hat_forward.2} parent=0 // pred_check_branch
    %11 = sbr.rel (0) target = $region9
  $region8: #{hat_forward.2} parent=0 // pred_region
    _
  $region9: #{hat_forward.2} parent=0 // pred_fallthru
    _
  // Predicated region
  $region10: #{hat_forward.2} parent=0 // pred_check
    _
  $region11: #{hat_forward.2} parent=0 // pred_check_branch
    %13 = sbr.rel (0) target = $region13
  $region12: #{hat_forward.2} parent=0 // pred_region
    _
  $region13: #{hat_forward.2} parent=0 // pred_fallthru
    _
  %v15 = vld [vmem:[%s1] sm:$0xf]
  %v16 = vld [vmem:[%s1 + $0x4] sm:$0xf]
  %v17 = vld [vmem:[%s0] sm:$0xf]
  %v18 = vld [vmem:[%s0 + $0x4] sm:$0xf]
  %v19 = vld [vmem:[%s0 + $0x8] sm:$0xf]
  %v20 = vld [vmem:[%s0 + $0xc] sm:$0xf]
  %v21 = vld [vmem:[%s0 + $0x10] sm:$0xf]
  %v22 = vld [vmem:[%s0 + $0x14] sm:$0xf]
  %v23 = vld [vmem:[%s0 + $0x18] sm:$0xf]
  %v24 = vld [vmem:[%s0 + $0x1c] sm:$0xf]
  %v25 = vld [vmem:[%s0 + $0x20] sm:$0xf]
  %v26 = vld [vmem:[%s0 + $0x24] sm:$0xf]
  %v27 = vld [vmem:[%s0 + $0x28] sm:$0xf]
  %v28 = vld [vmem:[%s0 + $0x2c] sm:$0xf]
  %v29 = vld [vmem:[%s0 + $0x30] sm:$0xf]
  %v43 = vunpack.c.l.b16 %v17
  %v44 = vunpack.c.l.b16 %v18
  %v45 = vunpack.c.l.b16 %v19
  %v46 = vunpack.c.l.b16 %v20
  %v47 = vunpack.c.l.b16 %v21
  %v48 = vunpack.c.l.b16 %v22
  %v49 = vunpack.c.l.b16 %v23
  %v50 = vunpack.c.l.b16 %v24
  %v51 = vunpack.c.l.b16 %v25
  %v52 = vunpack.c.l.b16 %v26
  %v53 = vunpack.c.l.b16 %v27
  %v54 = vunpack.c.l.b16 %v28
  %v55 = vunpack.c.l.b16 %v29
  %v56 = vpack.c.b16 %v44, %v43
  %v57 = vpack.c.b16 %v46, %v45
  %v58 = vpack.c.b16 %v48, %v47
  %v59 = vpack.c.b16 %v50, %v49
  %v60 = vpack.c.b16 %v52, %v51
  %v61 = vpack.c.b16 %v54, %v53
  %v62 = vpack.c.b16 %v55, %v55
  %v65 = vunpack.c.l.b16 %v15
  %v66 = vunpack.c.l.b16 %v16
  %v67 = vpack.c.b16 %v66, %v65
  %vm69 = vcmask 130048
  %v71 = vsel %vm69, %v56, 0
  %v74 = vsel %vm69, %v57, 0
  %v77 = vsel %vm69, %v58, 0
  %v80 = vsel %vm69, %v59, 0
  %v83 = vsel %vm69, %v60, 0
  %v86 = vsel %vm69, %v61, 0
  %v89 = vsel %vm69, %v62, 0
  %91 = vmatprep.subr.bf16.mxu0 0
  %92 = vmatpush1.bf16.msra.mxu0 %v67
  %93 = vmatprep.subr.bf16.mxu0 0
  %94 = vmatpush1.bf16.msra.mxu0 0
  %95 = vmatprep.subr.bf16.mxu0 0
  %96 = vmatpush1.bf16.msra.mxu0 0
  %97 = vmatprep.subr.bf16.mxu0 0
  %98 = vmatpush1.bf16.msra.mxu0 0
  %99 = vmatprep.subr.bf16.mxu0 0
  %100 = vmatpush1.bf16.msra.mxu0 0
  %101 = vmatprep.subr.bf16.mxu0 0
  %102 = vmatpush1.bf16.msra.mxu0 0
  %103 = vmatprep.subr.bf16.mxu0 0
  %104 = vmatpush1.bf16.msra.mxu0 0
  %105 = vmatprep.subr.bf16.mxu0 0
  %106 = vmatpush1.bf16.msra.mxu0 0
  %107 = vmatprep.subr.bf16.mxu0 0
  %108 = vmatpush1.bf16.msra.mxu0 0
  %109 = vmatprep.subr.bf16.mxu0 0
  %110 = vmatpush1.bf16.msra.mxu0 0
  %111 = vmatprep.subr.bf16.mxu0 0
  %112 = vmatpush1.bf16.msra.mxu0 0
  %113 = vmatprep.subr.bf16.mxu0 0
  %114 = vmatpush1.bf16.msra.mxu0 0
  %115 = vmatprep.subr.bf16.mxu0 0
  %116 = vmatpush1.bf16.msra.mxu0 0
  %117 = vmatprep.subr.bf16.mxu0 0
  %118 = vmatpush1.bf16.msra.mxu0 0
  %119 = vmatprep.subr.bf16.mxu0 0
  %120 = vmatpush1.bf16.msra.mxu0 0
  %121 = vmatprep.subr.bf16.mxu0 0
  %122 = vmatpush1.bf16.msra.mxu0 0
  %123 = vmatprep.mubr.bf16.mxu0 0
  %124 = vmatmul.mubr.bf16.gmra.mrb[0].mxu0 %v71
  %v125 = vpop.f32.mrb[0].mxu0
  %v126 = vadd.f32 0.0, %v125
  %v127 = vpop.f32.mrb[0].mxu0
  %v128 = vpop.f32.mrb[0].mxu0
  %v129 = vadd.f32 0.0, %v128
  %v130 = vpop.f32.mrb[0].mxu0
  %131 = vmatprep.mubr.bf16.mxu0 0
  %132 = vmatmul.mubr.bf16.gmra.mrb[0].mxu0 %v74
  %v133 = vpop.f32.mrb[0].mxu0
  %v134 = vadd.f32 0.0, %v133
  %v135 = vpop.f32.mrb[0].mxu0
  %v136 = vpop.f32.mrb[0].mxu0
  %v137 = vadd.f32 0.0, %v136
  %v138 = vpop.f32.mrb[0].mxu0
  %139 = vmatprep.mubr.bf16.mxu0 0
  %140 = vmatmul.mubr.bf16.gmra.mrb[0].mxu0 %v77
  %v141 = vpop.f32.mrb[0].mxu0
  %v142 = vadd.f32 0.0, %v141
  %v143 = vpop.f32.mrb[0].mxu0
  %v144 = vpop.f32.mrb[0].mxu0
  %v145 = vadd.f32 0.0, %v144
  %v146 = vpop.f32.mrb[0].mxu0
  %147 = vmatprep.mubr.bf16.mxu0 0
  %148 = vmatmul.mubr.bf16.gmra.mrb[0].mxu0 %v80
  %v149 = vpop.f32.mrb[0].mxu0
  %v150 = vadd.f32 0.0, %v149
  %v151 = vpop.f32.mrb[0].mxu0
  %v152 = vpop.f32.mrb[0].mxu0
  %v153 = vadd.f32 0.0, %v152
  %v154 = vpop.f32.mrb[0].mxu0
  %155 = vmatprep.mubr.bf16.mxu0 0
  %156 = vmatmul.mubr.bf16.gmra.mrb[0].mxu0 %v83
  %v157 = vpop.f32.mrb[0].mxu0
  %v158 = vadd.f32 0.0, %v157
  %v159 = vpop.f32.mrb[0].mxu0
  %v160 = vpop.f32.mrb[0].mxu0
  %v161 = vadd.f32 0.0, %v160
  %v162 = vpop.f32.mrb[0].mxu0
  %163 = vmatprep.mubr.bf16.mxu0 0
  %164 = vmatmul.mubr.bf16.gmra.mrb[0].mxu0 %v86
  %v165 = vpop.f32.mrb[0].mxu0
  %v166 = vadd.f32 0.0, %v165
  %v167 = vpop.f32.mrb[0].mxu0
  %v168 = vpop.f32.mrb[0].mxu0
  %v169 = vadd.f32 0.0, %v168
  %v170 = vpop.f32.mrb[0].mxu0
  %171 = vmatprep.mubr.bf16.mxu0 0
  %172 = vmatmul.mubr.bf16.gmra.mrb[0].mxu0 %v89
  %v173 = vpop.f32.mrb[0].mxu0
  %v174 = vadd.f32 0.0, %v173
  %v175 = vpop.f32.mrb[0].mxu0
  %v176 = vpop.f32.mrb[0].mxu0
  %v177 = vpop.f32.mrb[0].mxu0
  %178 = vdwg.mxu0
  %s179 = scalar_lea.vmem %s0, 52
  %v180 = vld [vmem:[%s179] sm:$0xf]
  %v181 = vld [vmem:[%s179 + $0x4] sm:$0xf]
  %v182 = vld [vmem:[%s179 + $0x8] sm:$0xf]
  %v183 = vld [vmem:[%s179 + $0xc] sm:$0xf]
  %v184 = vld [vmem:[%s179 + $0x10] sm:$0xf]
  %v185 = vld [vmem:[%s179 + $0x14] sm:$0xf]
  %v186 = vld [vmem:[%s179 + $0x18] sm:$0xf]
  %v187 = vld [vmem:[%s179 + $0x1c] sm:$0xf]
  %v188 = vld [vmem:[%s179 + $0x20] sm:$0xf]
  %v189 = vld [vmem:[%s179 + $0x24] sm:$0xf]
  %v190 = vld [vmem:[%s179 + $0x28] sm:$0xf]
  %v191 = vld [vmem:[%s179 + $0x2c] sm:$0xf]
  %v192 = vld [vmem:[%s179 + $0x30] sm:$0xf]
  %v206 = vunpack.c.l.b16 %v180
  %v207 = vunpack.c.l.b16 %v181
  %v208 = vunpack.c.l.b16 %v182
  %v209 = vunpack.c.l.b16 %v183
  %v210 = vunpack.c.l.b16 %v184
  %v211 = vunpack.c.l.b16 %v185
  %v212 = vunpack.c.l.b16 %v186
  %v213 = vunpack.c.l.b16 %v187
  %v214 = vunpack.c.l.b16 %v188
  %v215 = vunpack.c.l.b16 %v189
  %v216 = vunpack.c.l.b16 %v190
  %v217 = vunpack.c.l.b16 %v191
  %v218 = vunpack.c.l.b16 %v192
  %v219 = vpack.c.b16 %v207, %v206
  %v220 = vpack.c.b16 %v209, %v208
  %v221 = vpack.c.b16 %v211, %v210
  %v222 = vpack.c.b16 %v213, %v212
  %v223 = vpack.c.b16 %v215, %v214
  %v224 = vpack.c.b16 %v217, %v216
  %v225 = vpack.c.b16 %v218, %v218
  %v227 = vsel %vm69, %v219, 0
  %v230 = vsel %vm69, %v220, 0
  %v233 = vsel %vm69, %v221, 0
  %v236 = vsel %vm69, %v222, 0
  %v239 = vsel %vm69, %v223, 0
  %v242 = vsel %vm69, %v224, 0
  %v245 = vsel %vm69, %v225, 0
  %247 = vmatprep.subr.bf16.mxu0 0
  %248 = vmatpush1.bf16.msra.mxu0 %v67
  %249 = vmatprep.subr.bf16.mxu0 0
  %250 = vmatpush1.bf16.msra.mxu0 0
  %251 = vmatprep.subr.bf16.mxu0 0
  %252 = vmatpush1.bf16.msra.mxu0 0
  %253 = vmatprep.subr.bf16.mxu0 0
  %254 = vmatpush1.bf16.msra.mxu0 0
  %255 = vmatprep.subr.bf16.mxu0 0
  %256 = vmatpush1.bf16.msra.mxu0 0
  %257 = vmatprep.subr.bf16.mxu0 0
  %258 = vmatpush1.bf16.msra.mxu0 0
  %259 = vmatprep.subr.bf16.mxu0 0
  %260 = vmatpush1.bf16.msra.mxu0 0
  %261 = vmatprep.subr.bf16.mxu0 0
  %262 = vmatpush1.bf16.msra.mxu0 0
  %263 = vmatprep.subr.bf16.mxu0 0
  %264 = vmatpush1.bf16.msra.mxu0 0
  %265 = vmatprep.subr.bf16.mxu0 0
  %266 = vmatpush1.bf16.msra.mxu0 0
  %267 = vmatprep.subr.bf16.mxu0 0
  %268 = vmatpush1.bf16.msra.mxu0 0
  %269 = vmatprep.subr.bf16.mxu0 0
  %270 = vmatpush1.bf16.msra.mxu0 0
  %271 = vmatprep.subr.bf16.mxu0 0
  %272 = vmatpush1.bf16.msra.mxu0 0
  %273 = vmatprep.subr.bf16.mxu0 0
  %274 = vmatpush1.bf16.msra.mxu0 0
  %275 = vmatprep.subr.bf16.mxu0 0
  %276 = vmatpush1.bf16.msra.mxu0 0
  %277 = vmatprep.subr.bf16.mxu0 0
  %278 = vmatpush1.bf16.msra.mxu0 0
  %279 = vmatprep.mubr.bf16.mxu0 0
  %280 = vmatmul.mubr.bf16.gmra.mrb[0].mxu0 %v227
  %v281 = vpop.f32.mrb[0].mxu0
  %v282 = vadd.f32 0.0, %v281
  %v283 = vpop.f32.mrb[0].mxu0
  %v284 = vpop.f32.mrb[0].mxu0
  %v285 = vadd.f32 0.0, %v284
  %v286 = vpop.f32.mrb[0].mxu0
  %287 = vmatprep.mubr.bf16.mxu0 0
  %288 = vmatmul.mubr.bf16.gmra.mrb[0].mxu0 %v230
  %v289 = vpop.f32.mrb[0].mxu0
  %v290 = vadd.f32 0.0, %v289
  %v291 = vpop.f32.mrb[0].mxu0
  %v292 = vpop.f32.mrb[0].mxu0
  %v293 = vadd.f32 0.0, %v292
  %v294 = vpop.f32.mrb[0].mxu0
  %295 = vmatprep.mubr.bf16.mxu0 0
  %296 = vmatmul.mubr.bf16.gmra.mrb[0].mxu0 %v233
  %v297 = vpop.f32.mrb[0].mxu0
  %v298 = vadd.f32 0.0, %v297
  %v299 = vpop.f32.mrb[0].mxu0
  %v300 = vpop.f32.mrb[0].mxu0
  %v301 = vadd.f32 0.0, %v300
  %v302 = vpop.f32.mrb[0].mxu0
  %303 = vmatprep.mubr.bf16.mxu0 0
  %304 = vmatmul.mubr.bf16.gmra.mrb[0].mxu0 %v236
  %v305 = vpop.f32.mrb[0].mxu0
  %v306 = vadd.f32 0.0, %v305
  %v307 = vpop.f32.mrb[0].mxu0
  %v308 = vpop.f32.mrb[0].mxu0
  %v309 = vadd.f32 0.0, %v308
  %v310 = vpop.f32.mrb[0].mxu0
  %311 = vmatprep.mubr.bf16.mxu0 0
  %312 = vmatmul.mubr.bf16.gmra.mrb[0].mxu0 %v239
  %v313 = vpop.f32.mrb[0].mxu0
  %v314 = vadd.f32 0.0, %v313
  %v315 = vpop.f32.mrb[0].mxu0
  %v316 = vpop.f32.mrb[0].mxu0
  %v317 = vadd.f32 0.0, %v316
  %v318 = vpop.f32.mrb[0].mxu0
  %319 = vmatprep.mubr.bf16.mxu0 0
  %320 = vmatmul.mubr.bf16.gmra.mrb[0].mxu0 %v242
  %v321 = vpop.f32.mrb[0].mxu0
  %v322 = vadd.f32 0.0, %v321
  %v323 = vpop.f32.mrb[0].mxu0
  %v324 = vpop.f32.mrb[0].mxu0
  %v325 = vadd.f32 0.0, %v324
  %v326 = vpop.f32.mrb[0].mxu0
  %327 = vmatprep.mubr.bf16.mxu0 0
  %328 = vmatmul.mubr.bf16.gmra.mrb[0].mxu0 %v245
  %v329 = vpop.f32.mrb[0].mxu0
  %v330 = vadd.f32 0.0, %v329
  %v331 = vpop.f32.mrb[0].mxu0
  %v332 = vpop.f32.mrb[0].mxu0
  %v333 = vpop.f32.mrb[0].mxu0
  %334 = vdwg.mxu0
  %v335 = vmax.f32 %v126, %v282
  %v336 = vmax.f32 %v129, %v285
  %v337 = vmax.f32 %v134, %v290
  %v338 = vmax.f32 %v137, %v293
  %v339 = vmax.f32 %v142, %v298
  %v340 = vmax.f32 %v145, %v301
  %v341 = vmax.f32 %v150, %v306
  %v342 = vmax.f32 %v153, %v309
  %v343 = vmax.f32 %v158, %v314
  %v344 = vmax.f32 %v161, %v317
  %v345 = vmax.f32 %v166, %v322
  %v346 = vmax.f32 %v169, %v325
  %v347 = vmax.f32 %v174, %v330
  %s348 = scalar_lea.vmem %s0, 104
  %v349 = vld [vmem:[%s348] sm:$0xf]
  %v350 = vld [vmem:[%s348 + $0x4] sm:$0xf]
  %v351 = vld [vmem:[%s348 + $0x8] sm:$0xf]
  %v352 = vld [vmem:[%s348 + $0xc] sm:$0xf]
  %v353 = vld [vmem:[%s348 + $0x10] sm:$0xf]
  %v354 = vld [vmem:[%s348 + $0x14] sm:$0xf]
  %v355 = vld [vmem:[%s348 + $0x18] sm:$0xf]
  %v356 = vld [vmem:[%s348 + $0x1c] sm:$0xf]
  %v357 = vld [vmem:[%s348 + $0x20] sm:$0xf]
  %v358 = vld [vmem:[%s348 + $0x24] sm:$0xf]
  %v359 = vld [vmem:[%s348 + $0x28] sm:$0xf]
  %v360 = vld [vmem:[%s348 + $0x2c] sm:$0xf]
  %v361 = vld [vmem:[%s348 + $0x30] sm:$0xf]
  %v375 = vunpack.c.l.b16 %v349
  %v376 = vunpack.c.l.b16 %v350
  %v377 = vunpack.c.l.b16 %v351
  %v378 = vunpack.c.l.b16 %v352
  %v379 = vunpack.c.l.b16 %v353
  %v380 = vunpack.c.l.b16 %v354
  %v381 = vunpack.c.l.b16 %v355
  %v382 = vunpack.c.l.b16 %v356
  %v383 = vunpack.c.l.b16 %v357
  %v384 = vunpack.c.l.b16 %v358
  %v385 = vunpack.c.l.b16 %v359
  %v386 = vunpack.c.l.b16 %v360
  %v387 = vunpack.c.l.b16 %v361
  %v388 = vpack.c.b16 %v376, %v375
  %v389 = vpack.c.b16 %v378, %v377
  %v390 = vpack.c.b16 %v380, %v379
  %v391 = vpack.c.b16 %v382, %v381
  %v392 = vpack.c.b16 %v384, %v383
  %v393 = vpack.c.b16 %v386, %v385
  %v394 = vpack.c.b16 %v387, %v387
  %v396 = vsel %vm69, %v388, 0
  %v399 = vsel %vm69, %v389, 0
  %v402 = vsel %vm69, %v390, 0
  %v405 = vsel %vm69, %v391, 0
  %v408 = vsel %vm69, %v392, 0
  %v411 = vsel %vm69, %v393, 0
  %v414 = vsel %vm69, %v394, 0
  %416 = vmatprep.subr.bf16.mxu0 0
  %417 = vmatpush1.bf16.msra.mxu0 %v67
  %418 = vmatprep.subr.bf16.mxu0 0
  %419 = vmatpush1.bf16.msra.mxu0 0
  %420 = vmatprep.subr.bf16.mxu0 0
  %421 = vmatpush1.bf16.msra.mxu0 0
  %422 = vmatprep.subr.bf16.mxu0 0
  %423 = vmatpush1.bf16.msra.mxu0 0
  %424 = vmatprep.subr.bf16.mxu0 0
  %425 = vmatpush1.bf16.msra.mxu0 0
  %426 = vmatprep.subr.bf16.mxu0 0
  %427 = vmatpush1.bf16.msra.mxu0 0
  %428 = vmatprep.subr.bf16.mxu0 0
  %429 = vmatpush1.bf16.msra.mxu0 0
  %430 = vmatprep.subr.bf16.mxu0 0
  %431 = vmatpush1.bf16.msra.mxu0 0
  %432 = vmatprep.subr.bf16.mxu0 0
  %433 = vmatpush1.bf16.msra.mxu0 0
  %434 = vmatprep.subr.bf16.mxu0 0
  %435 = vmatpush1.bf16.msra.mxu0 0
  %436 = vmatprep.subr.bf16.mxu0 0
  %437 = vmatpush1.bf16.msra.mxu0 0
  %438 = vmatprep.subr.bf16.mxu0 0
  %439 = vmatpush1.bf16.msra.mxu0 0
  %440 = vmatprep.subr.bf16.mxu0 0
  %441 = vmatpush1.bf16.msra.mxu0 0
  %442 = vmatprep.subr.bf16.mxu0 0
  %443 = vmatpush1.bf16.msra.mxu0 0
  %444 = vmatprep.subr.bf16.mxu0 0
  %445 = vmatpush1.bf16.msra.mxu0 0
  %446 = vmatprep.subr.bf16.mxu0 0
  %447 = vmatpush1.bf16.msra.mxu0 0
  %448 = vmatprep.mubr.bf16.mxu0 0
  %449 = vmatmul.mubr.bf16.gmra.mrb[0].mxu0 %v396
  %v450 = vpop.f32.mrb[0].mxu0
  %v451 = vadd.f32 0.0, %v450
  %v452 = vpop.f32.mrb[0].mxu0
  %v453 = vpop.f32.mrb[0].mxu0
  %v454 = vadd.f32 0.0, %v453
  %v455 = vpop.f32.mrb[0].mxu0
  %456 = vmatprep.mubr.bf16.mxu0 0
  %457 = vmatmul.mubr.bf16.gmra.mrb[0].mxu0 %v399
  %v458 = vpop.f32.mrb[0].mxu0
  %v459 = vadd.f32 0.0, %v458
  %v460 = vpop.f32.mrb[0].mxu0
  %v461 = vpop.f32.mrb[0].mxu0
  %v462 = vadd.f32 0.0, %v461
  %v463 = vpop.f32.mrb[0].mxu0
  %464 = vmatprep.mubr.bf16.mxu0 0
  %465 = vmatmul.mubr.bf16.gmra.mrb[0].mxu0 %v402
  %v466 = vpop.f32.mrb[0].mxu0
  %v467 = vadd.f32 0.0, %v466
  %v468 = vpop.f32.mrb[0].mxu0
  %v469 = vpop.f32.mrb[0].mxu0
  %v470 = vadd.f32 0.0, %v469
  %v471 = vpop.f32.mrb[0].mxu0
  %472 = vmatprep.mubr.bf16.mxu0 0
  %473 = vmatmul.mubr.bf16.gmra.mrb[0].mxu0 %v405
  %v474 = vpop.f32.mrb[0].mxu0
  %v475 = vadd.f32 0.0, %v474
  %v476 = vpop.f32.mrb[0].mxu0
  %v477 = vpop.f32.mrb[0].mxu0
  %v478 = vadd.f32 0.0, %v477
  %v479 = vpop.f32.mrb[0].mxu0
  %480 = vmatprep.mubr.bf16.mxu0 0
  %481 = vmatmul.mubr.bf16.gmra.mrb[0].mxu0 %v408
  %v482 = vpop.f32.mrb[0].mxu0
  %v483 = vadd.f32 0.0, %v482
  %v484 = vpop.f32.mrb[0].mxu0
  %v485 = vpop.f32.mrb[0].mxu0
  %v486 = vadd.f32 0.0, %v485
  %v487 = vpop.f32.mrb[0].mxu0
  %488 = vmatprep.mubr.bf16.mxu0 0
  %489 = vmatmul.mubr.bf16.gmra.mrb[0].mxu0 %v411
  %v490 = vpop.f32.mrb[0].mxu0
  %v491 = vadd.f32 0.0, %v490
  %v492 = vpop.f32.mrb[0].mxu0
  %v493 = vpop.f32.mrb[0].mxu0
  %v494 = vadd.f32 0.0, %v493
  %v495 = vpop.f32.mrb[0].mxu0
  %496 = vmatprep.mubr.bf16.mxu0 0
  %497 = vmatmul.mubr.bf16.gmra.mrb[0].mxu0 %v414
  %v498 = vpop.f32.mrb[0].mxu0
  %v499 = vadd.f32 0.0, %v498
  %v500 = vpop.f32.mrb[0].mxu0
  %v501 = vpop.f32.mrb[0].mxu0
  %v502 = vpop.f32.mrb[0].mxu0
  %503 = vdwg.mxu0
  %v504 = vmax.f32 %v335, %v451
  %v505 = vmax.f32 %v336, %v454
  %v506 = vmax.f32 %v337, %v459
  %v507 = vmax.f32 %v338, %v462
  %v508 = vmax.f32 %v339, %v467
  %v509 = vmax.f32 %v340, %v470
  %v510 = vmax.f32 %v341, %v475
  %v511 = vmax.f32 %v342, %v478
  %v512 = vmax.f32 %v343, %v483
  %v513 = vmax.f32 %v344, %v486
  %v514 = vmax.f32 %v345, %v491
  %v515 = vmax.f32 %v346, %v494
  %v516 = vmax.f32 %v347, %v499
  %s517 = scalar_lea.vmem %s0, 156
  %v518 = vld [vmem:[%s517] sm:$0xf]
  %v519 = vld [vmem:[%s517 + $0x4] sm:$0xf]
  %v520 = vld [vmem:[%s517 + $0x8] sm:$0xf]
  %v521 = vld [vmem:[%s517 + $0xc] sm:$0xf]
  %v522 = vld [vmem:[%s517 + $0x10] sm:$0xf]
  %v523 = vld [vmem:[%s517 + $0x14] sm:$0xf]
  %v524 = vld [vmem:[%s517 + $0x18] sm:$0xf]
  %v525 = vld [vmem:[%s517 + $0x1c] sm:$0xf]
  %v526 = vld [vmem:[%s517 + $0x20] sm:$0xf]
  %v527 = vld [vmem:[%s517 + $0x24] sm:$0xf]
  %v528 = vld [vmem:[%s517 + $0x28] sm:$0xf]
  %v529 = vld [vmem:[%s517 + $0x2c] sm:$0xf]
  %v530 = vld [vmem:[%s517 + $0x30] sm:$0xf]
  %v544 = vunpack.c.l.b16 %v518
  %v545 = vunpack.c.l.b16 %v519
  %v546 = vunpack.c.l.b16 %v520
  %v547 = vunpack.c.l.b16 %v521
  %v548 = vunpack.c.l.b16 %v522
  %v549 = vunpack.c.l.b16 %v523
  %v550 = vunpack.c.l.b16 %v524
  %v551 = vunpack.c.l.b16 %v525
  %v552 = vunpack.c.l.b16 %v526
  %v553 = vunpack.c.l.b16 %v527
  %v554 = vunpack.c.l.b16 %v528
  %v555 = vunpack.c.l.b16 %v529
  %v556 = vunpack.c.l.b16 %v530
  %v557 = vpack.c.b16 %v545, %v544
  %v558 = vpack.c.b16 %v547, %v546
  %v559 = vpack.c.b16 %v549, %v548
  %v560 = vpack.c.b16 %v551, %v550
  %v561 = vpack.c.b16 %v553, %v552
  %v562 = vpack.c.b16 %v555, %v554
  %v563 = vpack.c.b16 %v556, %v556
  %v565 = vsel %vm69, %v557, 0
  %v568 = vsel %vm69, %v558, 0
  %v571 = vsel %vm69, %v559, 0
  %v574 = vsel %vm69, %v560, 0
  %v577 = vsel %vm69, %v561, 0
  %v580 = vsel %vm69, %v562, 0
  %v583 = vsel %vm69, %v563, 0
  %585 = vmatprep.subr.bf16.mxu0 0
  %586 = vmatpush1.bf16.msra.mxu0 %v67
  %587 = vmatprep.subr.bf16.mxu0 0
  %588 = vmatpush1.bf16.msra.mxu0 0
  %589 = vmatprep.subr.bf16.mxu0 0
  %590 = vmatpush1.bf16.msra.mxu0 0
  %591 = vmatprep.subr.bf16.mxu0 0
  %592 = vmatpush1.bf16.msra.mxu0 0
  %593 = vmatprep.subr.bf16.mxu0 0
  %594 = vmatpush1.bf16.msra.mxu0 0
  %595 = vmatprep.subr.bf16.mxu0 0
  %596 = vmatpush1.bf16.msra.mxu0 0
  %597 = vmatprep.subr.bf16.mxu0 0
  %598 = vmatpush1.bf16.msra.mxu0 0
  %599 = vmatprep.subr.bf16.mxu0 0
  %600 = vmatpush1.bf16.msra.mxu0 0
  %601 = vmatprep.subr.bf16.mxu0 0
  %602 = vmatpush1.bf16.msra.mxu0 0
  %603 = vmatprep.subr.bf16.mxu0 0
  %604 = vmatpush1.bf16.msra.mxu0 0
  %605 = vmatprep.subr.bf16.mxu0 0
  %606 = vmatpush1.bf16.msra.mxu0 0
  %607 = vmatprep.subr.bf16.mxu0 0
  %608 = vmatpush1.bf16.msra.mxu0 0
  %609 = vmatprep.subr.bf16.mxu0 0
  %610 = vmatpush1.bf16.msra.mxu0 0
  %611 = vmatprep.subr.bf16.mxu0 0
  %612 = vmatpush1.bf16.msra.mxu0 0
  %613 = vmatprep.subr.bf16.mxu0 0
  %614 = vmatpush1.bf16.msra.mxu0 0
  %615 = vmatprep.subr.bf16.mxu0 0
  %616 = vmatpush1.bf16.msra.mxu0 0
  %617 = vmatprep.mubr.bf16.mxu0 0
  %618 = vmatmul.mubr.bf16.gmra.mrb[0].mxu0 %v565
  %v619 = vpop.f32.mrb[0].mxu0
  %v620 = vadd.f32 0.0, %v619
  %v621 = vpop.f32.mrb[0].mxu0
  %v622 = vpop.f32.mrb[0].mxu0
  %v623 = vadd.f32 0.0, %v622
  %v624 = vpop.f32.mrb[0].mxu0
  %625 = vmatprep.mubr.bf16.mxu0 0
  %626 = vmatmul.mubr.bf16.gmra.mrb[0].mxu0 %v568
  %v627 = vpop.f32.mrb[0].mxu0
  %v628 = vadd.f32 0.0, %v627
  %v629 = vpop.f32.mrb[0].mxu0
  %v630 = vpop.f32.mrb[0].mxu0
  %v631 = vadd.f32 0.0, %v630
  %v632 = vpop.f32.mrb[0].mxu0
  %633 = vmatprep.mubr.bf16.mxu0 0
  %634 = vmatmul.mubr.bf16.gmra.mrb[0].mxu0 %v571
  %v635 = vpop.f32.mrb[0].mxu0
  %v636 = vadd.f32 0.0, %v635
  %v637 = vpop.f32.mrb[0].mxu0
  %v638 = vpop.f32.mrb[0].mxu0
  %v639 = vadd.f32 0.0, %v638
  %v640 = vpop.f32.mrb[0].mxu0
  %641 = vmatprep.mubr.bf16.mxu0 0
  %642 = vmatmul.mubr.bf16.gmra.mrb[0].mxu0 %v574
  %v643 = vpop.f32.mrb[0].mxu0
  %v644 = vadd.f32 0.0, %v643
  %v645 = vpop.f32.mrb[0].mxu0
  %v646 = vpop.f32.mrb[0].mxu0
  %v647 = vadd.f32 0.0, %v646
  %v648 = vpop.f32.mrb[0].mxu0
  %649 = vmatprep.mubr.bf16.mxu0 0
  %650 = vmatmul.mubr.bf16.gmra.mrb[0].mxu0 %v577
  %v651 = vpop.f32.mrb[0].mxu0
  %v652 = vadd.f32 0.0, %v651
  %v653 = vpop.f32.mrb[0].mxu0
  %v654 = vpop.f32.mrb[0].mxu0
  %v655 = vadd.f32 0.0, %v654
  %v656 = vpop.f32.mrb[0].mxu0
  %657 = vmatprep.mubr.bf16.mxu0 0
  %658 = vmatmul.mubr.bf16.gmra.mrb[0].mxu0 %v580
  %v659 = vpop.f32.mrb[0].mxu0
  %v660 = vadd.f32 0.0, %v659
  %v661 = vpop.f32.mrb[0].mxu0
  %v662 = vpop.f32.mrb[0].mxu0
  %v663 = vadd.f32 0.0, %v662
  %v664 = vpop.f32.mrb[0].mxu0
  %665 = vmatprep.mubr.bf16.mxu0 0
  %666 = vmatmul.mubr.bf16.gmra.mrb[0].mxu0 %v583
  %v667 = vpop.f32.mrb[0].mxu0
  %v668 = vadd.f32 0.0, %v667
  %v669 = vpop.f32.mrb[0].mxu0
  %v670 = vpop.f32.mrb[0].mxu0
  %v671 = vpop.f32.mrb[0].mxu0
  %672 = vdwg.mxu0
  %v673 = vmax.f32 %v504, %v620
  %v674 = vmax.f32 %v505, %v623
  %v675 = vmax.f32 %v506, %v628
  %v676 = vmax.f32 %v507, %v631
  %v677 = vmax.f32 %v508, %v636
  %v678 = vmax.f32 %v509, %v639
  %v679 = vmax.f32 %v510, %v644
  %v680 = vmax.f32 %v511, %v647
  %v681 = vmax.f32 %v512, %v652
  %v682 = vmax.f32 %v513, %v655
  %v683 = vmax.f32 %v514, %v660
  %v684 = vmax.f32 %v515, %v663
  %v685 = vmax.f32 %v516, %v668
  %v686 = vld [vmem:[%s2] sm:$0x1]
  %v688 = vlaneseq
  %v689 = vshrl.u32 %v688, 7
  %v690 = vsub.s32 0, %v689
  %v691 = vrot.slane %v686, %v690
  %v693 = vadd.f32 %v673, %v691
  %v694 = vadd.f32 %v674, %v691
  %v695 = vadd.f32 %v675, %v691
  %v696 = vadd.f32 %v676, %v691
  %v697 = vadd.f32 %v677, %v691
  %v698 = vadd.f32 %v678, %v691
  %v699 = vadd.f32 %v679, %v691
  %v700 = vadd.f32 %v680, %v691
  %v701 = vadd.f32 %v681, %v691
  %v702 = vadd.f32 %v682, %v691
  %v703 = vadd.f32 %v683, %v691
  %v704 = vadd.f32 %v684, %v691
  %v705 = vadd.f32 %v685, %v691
  %v706 = vmax.f32 %v693, 0.0
  %v707 = vmax.f32 %v694, 0.0
  %v708 = vmax.f32 %v695, 0.0
  %v709 = vmax.f32 %v696, 0.0
  %v710 = vmax.f32 %v697, 0.0
  %v711 = vmax.f32 %v698, 0.0
  %v712 = vmax.f32 %v699, 0.0
  %v713 = vmax.f32 %v700, 0.0
  %v714 = vmax.f32 %v701, 0.0
  %v715 = vmax.f32 %v702, 0.0
  %v716 = vmax.f32 %v703, 0.0
  %v717 = vmax.f32 %v704, 0.0
  %v718 = vmax.f32 %v705, 0.0
  %v719 = vpack.c.bf16 %v707, %v706
  %v720 = vpack.c.bf16 %v709, %v708
  %v721 = vpack.c.bf16 %v711, %v710
  %v722 = vpack.c.bf16 %v713, %v712
  %v723 = vpack.c.bf16 %v715, %v714
  %v724 = vpack.c.bf16 %v717, %v716
  %v725 = vpack.c.bf16 %v718, %v718
  %v733 = vunpack.c.l.b16 %v719
  %v734 = vunpack.c.h.b16 %v719
  %v735 = vunpack.c.l.b16 %v720
  %v736 = vunpack.c.h.b16 %v720
  %v737 = vunpack.c.l.b16 %v721
  %v738 = vunpack.c.h.b16 %v721
  %v739 = vunpack.c.l.b16 %v722
  %v740 = vunpack.c.h.b16 %v722
  %v741 = vunpack.c.l.b16 %v723
  %v742 = vunpack.c.h.b16 %v723
  %v743 = vunpack.c.l.b16 %v724
  %v744 = vunpack.c.h.b16 %v724
  %v745 = vunpack.c.l.b16 %v725
  %v746 = vpack.c.b16 %v733, %v733
  %v747 = vpack.c.b16 %v734, %v734
  %v748 = vpack.c.b16 %v735, %v735
  %v749 = vpack.c.b16 %v736, %v736
  %v750 = vpack.c.b16 %v737, %v737
  %v751 = vpack.c.b16 %v738, %v738
  %v752 = vpack.c.b16 %v739, %v739
  %v753 = vpack.c.b16 %v740, %v740
  %v754 = vpack.c.b16 %v741, %v741
  %v755 = vpack.c.b16 %v742, %v742
  %v756 = vpack.c.b16 %v743, %v743
  %v757 = vpack.c.b16 %v744, %v744
  %v758 = vpack.c.b16 %v745, %v745
  %vm772 = vcmask 519168
  %773 = vst.msk [vmem:[%s3] sm:$0xf] %vm772, %v746
  %774 = vst.msk [vmem:[%s3 + $0x4] sm:$0xf] %vm772, %v747
  %775 = vst.msk [vmem:[%s3 + $0x8] sm:$0xf] %vm772, %v748
  %776 = vst.msk [vmem:[%s3 + $0xc] sm:$0xf] %vm772, %v749
  %777 = vst.msk [vmem:[%s3 + $0x10] sm:$0xf] %vm772, %v750
  %778 = vst.msk [vmem:[%s3 + $0x14] sm:$0xf] %vm772, %v751
  %779 = vst.msk [vmem:[%s3 + $0x18] sm:$0xf] %vm772, %v752
  %780 = vst.msk [vmem:[%s3 + $0x1c] sm:$0xf] %vm772, %v753
  %781 = vst.msk [vmem:[%s3 + $0x20] sm:$0xf] %vm772, %v754
  %782 = vst.msk [vmem:[%s3 + $0x24] sm:$0xf] %vm772, %v755
  %783 = vst.msk [vmem:[%s3 + $0x28] sm:$0xf] %vm772, %v756
  %784 = vst.msk [vmem:[%s3 + $0x2c] sm:$0xf] %vm772, %v757
  %785 = vst.msk [vmem:[%s3 + $0x30] sm:$0xf] %vm772, %v758
  // Predicated region
  $region14: #{hat_forward.2} parent=0 // pred_check
    _
  $region15: #{hat_forward.2} parent=0 // pred_check_branch
    %787 = sbr.rel (0) target = $region17
  $region16: #{hat_forward.2} parent=0 // pred_region
    _
  $region17: #{hat_forward.2} parent=0 // pred_fallthru
    _
  // Predicated region
  $region18: #{hat_forward.2} parent=0 // pred_check
    _
  $region19: #{hat_forward.2} parent=0 // pred_check_branch
    %789 = sbr.rel (0) target = $region21
  $region20: #{hat_forward.2} parent=0 // pred_region
    _
  $region21: #{hat_forward.2} parent=0 // pred_fallthru
    _

// kernel: hat_forward.3
$region0: #{hat_forward.3}
  #allocation0 [shape = 'u32[]', space=smem, size = 0x4, offset = 0x4, fixed_abs, tag = 'smem constant byte address 0x4 - core index']
  #allocation1 [shape = 'u32[144,128]{1,0:T(1,128)}', space=vmem, size = 0x12000, scoped, tag = 'internal scratch']
  #allocation2 [shape = 'f32[8,128]{1,0:T(8,128)}', space=vmem, size = 0x1000, scoped, tag = 'scratch operand']
  %s0 = inlined_call_operand.vmem [shape: bf16[8,3200], index: 0, kind: input, shape index: {}]
  %s1 = inlined_call_operand.vmem [shape: bf16[3200,128], index: 1, kind: input, shape index: {}]
  %s2 = inlined_call_operand.vmem [shape: f32[1,128], index: 2, kind: input, shape index: {}]
  %s3 = inlined_call_operand.vmem [shape: bf16[128,128], index: 3, kind: input, shape index: {}]
  %s4 = inlined_call_operand.vmem [shape: f32[1,128], index: 4, kind: input, shape index: {}]
  %s5 = inlined_call_operand.vmem [shape: bf16[128,128], index: 5, kind: input, shape index: {}]
  %s6 = inlined_call_operand.vmem [shape: f32[1,128], index: 6, kind: input, shape index: {}]
  %s7 = inlined_call_operand.vmem [shape: f32[8,128], index: 7, kind: output, shape index: {}]
  %s8 = sld [smem:[#allocation0]]
  $region69: #{hat_forward.3} parent=0
    _
  %s10 = ssub.s32 1, %s8
  %s11 = scalar_select 0, %s10, %s8
  loop: start=0, step=1, limit=7
  $region2: #{hat_forward.3} parent=0 // loop_pre_header
    _
  $region3: #{hat_forward.3} parent=0 // loop_header
    %s13 = sphi 0, %s17
    %p14 = scmp.ge.s32.totalorder %s13, 7
    %s20 = sphi 0, %s32
    %s21 = sphi 0, %s28
    %s22 = sphi 0, %s20
    %s23 = sphi 0, %s21
    %s24 = sphi 0, %s22
    %s25 = sphi 0, %s23
    %s37 = sphi 0, %s39
    %s40 = sphi 0, %s37
    %s41 = sphi 0, %s40
    %s57 = sphi 0, %s41
    %s63 = sphi 0, %s65
    %s66 = sphi 0, %s63
    %s67 = sphi 0, %s66
    %s83 = sphi 0, %s67
    %s87 = sphi 0, %s87
    %s89 = sphi 0, %s87
    %s90 = sphi 0, %s89
    %s104 = sphi 0, %s90
    %s108 = sphi 0, %s108
    %s110 = sphi 0, %s108
    %s111 = sphi 0, %s110
    %s125 = sphi 0, %s111
    %s129 = sphi 0, %s129
    %s131 = sphi 0, %s129
    %s132 = sphi 0, %s131
    %s146 = sphi 0, %s132
    %s150 = sphi 0, %s150
    %s152 = sphi 0, %s150
    %s153 = sphi 0, %s152
    %s167 = sphi 0, %s153
    %s171 = sphi 0, %s171
    %s173 = sphi 0, %s171
    %s174 = sphi 0, %s173
    %s188 = sphi 0, %s174
    %s194 = sphi 0, %s196
    %s197 = sphi 0, %s194
    %s198 = sphi 0, %s197
    %s214 = sphi 0, %s198
  $region4: #{hat_forward.3} parent=0 // loop_header_branch
    %16 = sbr.rel (%p14) target = $region8
  $region5: #{hat_forward.3} parent=0 // loop_body
    %s18 = ssub.s32 %s13, 1
    %s19 = ssub.s32 %s13, 2
    %s26 = sadd.s32 1, %s21
    %p27 = scmp.ge.s32.totalorder %s26, 5
    %s28 = scalar_select %p27, 0, %s26
    %s29 = sadd.s32 1, %s20
    %s30 = scalar_select %p27, %s29, %s20
    %p31 = scmp.ge.s32.totalorder %s30, 1
    %s32 = scalar_select %p31, 0, %s30
    %s33 = ssub.s32 %s20, %s32
    %s34 = ssub.s32 %s21, %s28
    %s35 = sor.u32 %s33, %s34
    %p36 = scmp.eq.s32.totalorder %s35, 0
    %s38 = sadd.s32 %s37, 1
    %s39 = scalar_select %p36, %s37, %s38
    %p42 = pneg %p36
    %p43 = scmp.eq.s32.totalorder %s13, 4
    %p44 = por %p42, %p43
    %p45 = scmp.ne.s32.totalorder %s37, %s40
    %p46 = scmp.eq.s32.totalorder %s13, 0
    %p47 = por %p45, %p46
    %p48 = scmp.ne.s32.totalorder %s37, %s40
    %p49 = scmp.eq.s32.totalorder %s18, 4
    %p50 = por %p48, %p49
    %p51 = scmp.ne.s32.totalorder %s40, %s41
    %p52 = scmp.eq.s32.totalorder %s18, 0
    %p53 = por %p51, %p52
    %p54 = scmp.ne.s32.totalorder %s40, %s41
    %p55 = scmp.eq.s32.totalorder %s19, 4
    %p56 = por %p54, %p55
    %p58 = scmp.ne.s32.totalorder %s41, %s57
    %p59 = scmp.eq.s32.totalorder %s19, 0
    %p60 = por %p58, %p59
    %s61 = ssub.s32 %s21, %s28
    %p62 = scmp.eq.s32.totalorder %s61, 0
    %s64 = sadd.s32 %s63, 1
    %s65 = scalar_select %p62, %s63, %s64
    %p68 = pneg %p62
    %p69 = scmp.eq.s32.totalorder %s13, 4
    %p70 = por %p68, %p69
    %p71 = scmp.ne.s32.totalorder %s63, %s66
    %p72 = scmp.eq.s32.totalorder %s13, 0
    %p73 = por %p71, %p72
    %p74 = scmp.ne.s32.totalorder %s63, %s66
    %p75 = scmp.eq.s32.totalorder %s18, 4
    %p76 = por %p74, %p75
    %p77 = scmp.ne.s32.totalorder %s66, %s67
    %p78 = scmp.eq.s32.totalorder %s18, 0
    %p79 = por %p77, %p78
    %p80 = scmp.ne.s32.totalorder %s66, %s67
    %p81 = scmp.eq.s32.totalorder %s19, 4
    %p82 = por %p80, %p81
    %p84 = scmp.ne.s32.totalorder %s67, %s83
    %p85 = scmp.eq.s32.totalorder %s19, 0
    %p86 = por %p84, %p85
    %s88 = sadd.s32 %s87, 1
    %p91 = scmp.eq.s32.totalorder %s13, 4
    %p92 = scmp.ne.s32.totalorder %s87, %s89
    %p93 = scmp.eq.s32.totalorder %s13, 0
    %p94 = por %p92, %p93
    %p95 = scmp.ne.s32.totalorder %s87, %s89
    %p96 = scmp.eq.s32.totalorder %s18, 4
    %p97 = por %p95, %p96
    %p98 = scmp.ne.s32.totalorder %s89, %s90
    %p99 = scmp.eq.s32.totalorder %s18, 0
    %p100 = por %p98, %p99
    %p101 = scmp.ne.s32.totalorder %s89, %s90
    %p102 = scmp.eq.s32.totalorder %s19, 4
    %p103 = por %p101, %p102
    %p105 = scmp.ne.s32.totalorder %s90, %s104
    %p106 = scmp.eq.s32.totalorder %s19, 0
    %p107 = por %p105, %p106
    %s109 = sadd.s32 %s108, 1
    %p112 = scmp.eq.s32.totalorder %s13, 4
    %p113 = scmp.ne.s32.totalorder %s108, %s110
    %p114 = scmp.eq.s32.totalorder %s13, 0
    %p115 = por %p113, %p114
    %p116 = scmp.ne.s32.totalorder %s108, %s110
    %p117 = scmp.eq.s32.totalorder %s18, 4
    %p118 = por %p116, %p117
    %p119 = scmp.ne.s32.totalorder %s110, %s111
    %p120 = scmp.eq.s32.totalorder %s18, 0
    %p121 = por %p119, %p120
    %p122 = scmp.ne.s32.totalorder %s110, %s111
    %p123 = scmp.eq.s32.totalorder %s19, 4
    %p124 = por %p122, %p123
    %p126 = scmp.ne.s32.totalorder %s111, %s125
    %p127 = scmp.eq.s32.totalorder %s19, 0
    %p128 = por %p126, %p127
    %s130 = sadd.s32 %s129, 1
    %p133 = scmp.eq.s32.totalorder %s13, 4
    %p134 = scmp.ne.s32.totalorder %s129, %s131
    %p135 = scmp.eq.s32.totalorder %s13, 0
    %p136 = por %p134, %p135
    %p137 = scmp.ne.s32.totalorder %s129, %s131
    %p138 = scmp.eq.s32.totalorder %s18, 4
    %p139 = por %p137, %p138
    %p140 = scmp.ne.s32.totalorder %s131, %s132
    %p141 = scmp.eq.s32.totalorder %s18, 0
    %p142 = por %p140, %p141
    %p143 = scmp.ne.s32.totalorder %s131, %s132
    %p144 = scmp.eq.s32.totalorder %s19, 4
    %p145 = por %p143, %p144
    %p147 = scmp.ne.s32.totalorder %s132, %s146
    %p148 = scmp.eq.s32.totalorder %s19, 0
    %p149 = por %p147, %p148
    %s151 = sadd.s32 %s150, 1
    %p154 = scmp.eq.s32.totalorder %s13, 4
    %p155 = scmp.ne.s32.totalorder %s150, %s152
    %p156 = scmp.eq.s32.totalorder %s13, 0
    %p157 = por %p155, %p156
    %p158 = scmp.ne.s32.totalorder %s150, %s152
    %p159 = scmp.eq.s32.totalorder %s18, 4
    %p160 = por %p158, %p159
    %p161 = scmp.ne.s32.totalorder %s152, %s153
    %p162 = scmp.eq.s32.totalorder %s18, 0
    %p163 = por %p161, %p162
    %p164 = scmp.ne.s32.totalorder %s152, %s153
    %p165 = scmp.eq.s32.totalorder %s19, 4
    %p166 = por %p164, %p165
    %p168 = scmp.ne.s32.totalorder %s153, %s167
    %p169 = scmp.eq.s32.totalorder %s19, 0
    %p170 = por %p168, %p169
    %s172 = sadd.s32 %s171, 1
    %p175 = scmp.eq.s32.totalorder %s13, 4
    %p176 = scmp.ne.s32.totalorder %s171, %s173
    %p177 = scmp.eq.s32.totalorder %s13, 0
    %p178 = por %p176, %p177
    %p179 = scmp.ne.s32.totalorder %s171, %s173
    %p180 = scmp.eq.s32.totalorder %s18, 4
    %p181 = por %p179, %p180
    %p182 = scmp.ne.s32.totalorder %s173, %s174
    %p183 = scmp.eq.s32.totalorder %s18, 0
    %p184 = por %p182, %p183
    %p185 = scmp.ne.s32.totalorder %s173, %s174
    %p186 = scmp.eq.s32.totalorder %s19, 4
    %p187 = por %p185, %p186
    %p189 = scmp.ne.s32.totalorder %s174, %s188
    %p190 = scmp.eq.s32.totalorder %s19, 0
    %p191 = por %p189, %p190
    %s192 = ssub.s32 %s20, %s32
    %p193 = scmp.eq.s32.totalorder %s192, 0
    %s195 = sadd.s32 %s194, 1
    %s196 = scalar_select %p193, %s194, %s195
    %p199 = pneg %p193
    %p200 = scmp.eq.s32.totalorder %s13, 4
    %p201 = por %p199, %p200
    %p202 = scmp.ne.s32.totalorder %s194, %s197
    %p203 = scmp.eq.s32.totalorder %s13, 0
    %p204 = por %p202, %p203
    %p205 = scmp.ne.s32.totalorder %s194, %s197
    %p206 = scmp.eq.s32.totalorder %s18, 4
    %p207 = por %p205, %p206
    %p208 = scmp.ne.s32.totalorder %s197, %s198
    %p209 = scmp.eq.s32.totalorder %s18, 0
    %p210 = por %p208, %p209
    %p211 = scmp.ne.s32.totalorder %s197, %s198
    %p212 = scmp.eq.s32.totalorder %s19, 4
    %p213 = por %p211, %p212
    %p215 = scmp.ne.s32.totalorder %s198, %s214
    %p216 = scmp.eq.s32.totalorder %s19, 0
    %p217 = por %p215, %p216
    %p218 = scmp.le.s32.totalorder 1, %s13
    %p219 = scmp.lt.s32.totalorder %s13, 6
    %p220 = pnand %p218, %p219
    %p221 = pneg %p220
    // Predicated region
    $region9: #{hat_forward.3} parent=5 // pred_check
      _
    $region10: #{hat_forward.3} parent=5 // pred_check_branch
      %223 = sbr.rel (%p220) target = $region12
    $region11: #{hat_forward.3} parent=5 // pred_region
      %s224 = ssub.s32 %s13, 1
      // Predicated region
      $region13: #{hat_forward.3} parent=11 // pred_check
        %p225 = pneg %p100
      $region14: #{hat_forward.3} parent=11 // pred_check_branch
        %227 = sbr.rel (%p225) target = $region16
      $region15: #{hat_forward.3} parent=11 // pred_region
        _
      $region16: #{hat_forward.3} parent=11 // pred_fallthru
        _
      // Predicated region
      $region17: #{hat_forward.3} parent=11 // pred_check
        %p228 = pneg %p121
      $region18: #{hat_forward.3} parent=11 // pred_check_branch
        %230 = sbr.rel (%p228) target = $region20
      $region19: #{hat_forward.3} parent=11 // pred_region
        _
      $region20: #{hat_forward.3} parent=11 // pred_fallthru
        _
      // Predicated region
      $region21: #{hat_forward.3} parent=11 // pred_check
        %p231 = pneg %p142
      $region22: #{hat_forward.3} parent=11 // pred_check_branch
        %233 = sbr.rel (%p231) target = $region24
      $region23: #{hat_forward.3} parent=11 // pred_region
        _
      $region24: #{hat_forward.3} parent=11 // pred_fallthru
        _
      // Predicated region
      $region25: #{hat_forward.3} parent=11 // pred_check
        %p234 = pneg %p163
      $region26: #{hat_forward.3} parent=11 // pred_check_branch
        %236 = sbr.rel (%p234) target = $region28
      $region27: #{hat_forward.3} parent=11 // pred_region
        _
      $region28: #{hat_forward.3} parent=11 // pred_fallthru
        _
      // Predicated region
      $region29: #{hat_forward.3} parent=11 // pred_check
        %p237 = pneg %p184
      $region30: #{hat_forward.3} parent=11 // pred_check_branch
        %239 = sbr.rel (%p237) target = $region32
      $region31: #{hat_forward.3} parent=11 // pred_region
        _
      $region32: #{hat_forward.3} parent=11 // pred_fallthru
        _
    $region12: #{hat_forward.3} parent=5 // pred_fallthru
      _
    %p240 = scmp.lt.s32.totalorder %s13, 5
    // Predicated region
    $region33: #{hat_forward.3} parent=5 // pred_check
      %p241 = pneg %p240
    $region34: #{hat_forward.3} parent=5 // pred_check_branch
      %243 = sbr.rel (%p241) target = $region36
    $region35: #{hat_forward.3} parent=5 // pred_region
      // Predicated region
      $region37: #{hat_forward.3} parent=35 // pred_check
        %p244 = pneg %p47
      $region38: #{hat_forward.3} parent=35 // pred_check_branch
        %246 = sbr.rel (%p244) target = $region40
      $region39: #{hat_forward.3} parent=35 // pred_region
        %s247 = smul.u32 5, %s21
        %p248 = scmp.lt.s32.totalorder %s20, 0
        %s249 = scalar_select %p248, %s20, 0
        %p250 = scmp.lt.s32.totalorder %s247, 24
        %s251 = scalar_select %p250, %s247, 24
        %s252 = smul.addr %s249, 25
        %s253 = sadd.s32 %s251, %s252
        %s254 = smul.addr %s253, 4
        %s255 = scalar_lea.vmem %s0, %s254
        %s256 = smul.u32 5, %s21
      $region40: #{hat_forward.3} parent=35 // pred_fallthru
        _
      // Predicated region
      $region41: #{hat_forward.3} parent=35 // pred_check
        %p257 = pneg %p73
      $region42: #{hat_forward.3} parent=35 // pred_check_branch
        %259 = sbr.rel (%p257) target = $region44
      $region43: #{hat_forward.3} parent=35 // pred_region
        %s260 = smul.u32 80, %s21
        %p261 = scmp.lt.s32.totalorder %s260, 399
        %s262 = scalar_select %p261, %s260, 399
        %s263 = smul.addr %s262, 4
        %s264 = scalar_lea.vmem %s1, %s263
        %s265 = smul.u32 80, %s21
      $region44: #{hat_forward.3} parent=35 // pred_fallthru
        _
    $region36: #{hat_forward.3} parent=5 // pred_fallthru
      _
    %p266 = scmp.le.s32.totalorder 1, %s13
    %p267 = scmp.lt.s32.totalorder %s13, 6
    %p268 = pnand %p266, %p267
    %p269 = pneg %p268
    // Predicated region
    $region45: #{hat_forward.3} parent=5 // pred_check
      _
    $region46: #{hat_forward.3} parent=5 // pred_check_branch
      %271 = sbr.rel (%p268) target = $region48
    $region47: #{hat_forward.3} parent=5 // pred_region
      %s272 = ssub.s32 %s13, 1
      %s273 = smul.u32 5, %s23
      %p274 = scmp.lt.s32.totalorder %s22, 0
      %s275 = scalar_select %p274, %s22, 0
      %p276 = scmp.lt.s32.totalorder %s273, 24
      %s277 = scalar_select %p276, %s273, 24
      %s278 = smul.addr %s275, 25
      %s279 = sadd.s32 %s277, %s278
      %s280 = smul.addr %s279, 4
      %s281 = scalar_lea.vmem %s0, %s280
      %p282 = pneg %p53
      %p283 = pneg %p50
      %s284 = smul.u32 80, %s23
      %p285 = scmp.lt.s32.totalorder %s284, 399
      %s286 = scalar_select %p285, %s284, 399
      %s287 = smul.addr %s286, 4
      %s288 = scalar_lea.vmem %s1, %s287
      %p289 = pneg %p79
      %p290 = pneg %p76
      %p291 = pneg %p100
      %p292 = pneg %p97
      %p293 = pneg %p121
      %p294 = pneg %p118
      %p295 = pneg %p142
      %p296 = pneg %p139
      %p297 = pneg %p163
      %p298 = pneg %p160
      %p299 = pneg %p184
      %p300 = pneg %p181
      %p301 = pneg %p210
      %p302 = pneg %p207
      %p303 = scmp.lt.s32.totalorder %s22, 0
      %s304 = scalar_select %p303, %s22, 0
      %s305 = smul.addr %s304, 8
      %s306 = scalar_lea.vmem %s7, %s305
      %s307 = smul.u32 5, %s23
      %p308 = scmp.lt.s32.totalorder %s22, 0
      %s309 = scalar_select %p308, %s22, 0
      %p310 = scmp.lt.s32.totalorder %s307, 24
      %s311 = scalar_select %p310, %s307, 24
      %s312 = smul.addr %s309, 25
      %s313 = sadd.s32 %s311, %s312
      %s314 = smul.addr %s313, 4
      %s315 = scalar_lea.vmem %s0, %s314
      %s316 = smul.u32 5, %s23
      %s317 = smul.u32 80, %s23
      %p318 = scmp.lt.s32.totalorder %s317, 399
      %s319 = scalar_select %p318, %s317, 399
      %s320 = smul.addr %s319, 4
      %s321 = scalar_lea.vmem %s1, %s320
      %s322 = smul.u32 80, %s23
      %p323 = scmp.lt.s32.totalorder %s22, 0
      %s324 = scalar_select %p323, %s22, 0
      %s325 = smul.addr %s324, 8
      %s326 = scalar_lea.vmem %s7, %s325
      %p328 = scmp.eq.s32.totalorder %s23, 0
      // Predicated region
      $region49: #{hat_forward.3} parent=47 // pred_check
        %p329 = pneg %p328
      $region50: #{hat_forward.3} parent=47 // pred_check_branch
        %331 = sbr.rel (%p329) target = $region52
      $region51: #{hat_forward.3} parent=47 // pred_region
        %332 = vst [vmem:[#allocation2] sm:$0xff] 0.0
      $region52: #{hat_forward.3} parent=47 // pred_fallthru
        _
      %v333 = vld [vmem:[#allocation2] sm:$0xff]
      %v334 = vld [vmem:[%s315] sm:$0xff]
      %v335 = vld [vmem:[%s315 + $0x8] sm:$0xff]
      %v336 = vld [vmem:[%s315 + $0x10] sm:$0xf]
      %v337 = vld [vmem:[%s321] sm:$0xf]
      %v338 = vld [vmem:[%s321 + $0x4] sm:$0xf]
      %v339 = vld [vmem:[%s321 + $0x8] sm:$0xf]
      %v340 = vld [vmem:[%s321 + $0xc] sm:$0xf]
      %v341 = vld [vmem:[%s321 + $0x10] sm:$0xf]
      %v342 = vld [vmem:[%s321 + $0x14] sm:$0xf]
      %v343 = vld [vmem:[%s321 + $0x18] sm:$0xf]
      %v344 = vld [vmem:[%s321 + $0x1c] sm:$0xf]
      %v345 = vld [vmem:[%s321 + $0x20] sm:$0xf]
      %v346 = vld [vmem:[%s321 + $0x24] sm:$0xf]
      %v347 = vld [vmem:[%s321 + $0x28] sm:$0xf]
      %v348 = vld [vmem:[%s321 + $0x2c] sm:$0xf]
      %v349 = vld [vmem:[%s321 + $0x30] sm:$0xf]
      %v350 = vld [vmem:[%s321 + $0x34] sm:$0xf]
      %v351 = vld [vmem:[%s321 + $0x38] sm:$0xf]
      %v352 = vld [vmem:[%s321 + $0x3c] sm:$0xf]
      %v353 = vld [vmem:[%s321 + $0x40] sm:$0xf]
      %v354 = vld [vmem:[%s321 + $0x44] sm:$0xf]
      %v355 = vld [vmem:[%s321 + $0x48] sm:$0xf]
      %v356 = vld [vmem:[%s321 + $0x4c] sm:$0xf]
      %v357 = vld [vmem:[%s321 + $0x50] sm:$0xf]
      %v358 = vld [vmem:[%s321 + $0x54] sm:$0xf]
      %v359 = vld [vmem:[%s321 + $0x58] sm:$0xf]
      %v360 = vld [vmem:[%s321 + $0x5c] sm:$0xf]
      %v361 = vld [vmem:[%s321 + $0x60] sm:$0xf]
      %v362 = vld [vmem:[%s321 + $0x64] sm:$0xf]
      %v363 = vld [vmem:[%s321 + $0x68] sm:$0xf]
      %v364 = vld [vmem:[%s321 + $0x6c] sm:$0xf]
      %v365 = vld [vmem:[%s321 + $0x70] sm:$0xf]
      %v366 = vld [vmem:[%s321 + $0x74] sm:$0xf]
      %v367 = vld [vmem:[%s321 + $0x78] sm:$0xf]
      %v368 = vld [vmem:[%s321 + $0x7c] sm:$0xf]
      %v369 = vld [vmem:[%s321 + $0x80] sm:$0xf]
      %v370 = vld [vmem:[%s321 + $0x84] sm:$0xf]
      %v371 = vld [vmem:[%s321 + $0x88] sm:$0xf]
      %v372 = vld [vmem:[%s321 + $0x8c] sm:$0xf]
      %v373 = vld [vmem:[%s321 + $0x90] sm:$0xf]
      %v374 = vld [vmem:[%s321 + $0x94] sm:$0xf]
      %v375 = vld [vmem:[%s321 + $0x98] sm:$0xf]
      %v376 = vld [vmem:[%s321 + $0x9c] sm:$0xf]
      %v377 = vld [vmem:[%s321 + $0xa0] sm:$0xf]
      %v378 = vld [vmem:[%s321 + $0xa4] sm:$0xf]
      %v379 = vld [vmem:[%s321 + $0xa8] sm:$0xf]
      %v380 = vld [vmem:[%s321 + $0xac] sm:$0xf]
      %v381 = vld [vmem:[%s321 + $0xb0] sm:$0xf]
      %v382 = vld [vmem:[%s321 + $0xb4] sm:$0xf]
      %v383 = vld [vmem:[%s321 + $0xb8] sm:$0xf]
      %v384 = vld [vmem:[%s321 + $0xbc] sm:$0xf]
      %v385 = vld [vmem:[%s321 + $0xc0] sm:$0xf]
      %v386 = vld [vmem:[%s321 + $0xc4] sm:$0xf]
      %v387 = vld [vmem:[%s321 + $0xc8] sm:$0xf]
      %v388 = vld [vmem:[%s321 + $0xcc] sm:$0xf]
      %v389 = vld [vmem:[%s321 + $0xd0] sm:$0xf]
      %v390 = vld [vmem:[%s321 + $0xd4] sm:$0xf]
      %v391 = vld [vmem:[%s321 + $0xd8] sm:$0xf]
      %v392 = vld [vmem:[%s321 + $0xdc] sm:$0xf]
      %v393 = vld [vmem:[%s321 + $0xe0] sm:$0xf]
      %v394 = vld [vmem:[%s321 + $0xe4] sm:$0xf]
      %v395 = vld [vmem:[%s321 + $0xe8] sm:$0xf]
      %v396 = vld [vmem:[%s321 + $0xec] sm:$0xf]
      %v397 = vld [vmem:[%s321 + $0xf0] sm:$0xf]
      %v398 = vld [vmem:[%s321 + $0xf4] sm:$0xf]
      %v399 = vld [vmem:[%s321 + $0xf8] sm:$0xf]
      %v400 = vld [vmem:[%s321 + $0xfc] sm:$0xf]
      %v401 = vld [vmem:[%s321 + $0x100] sm:$0xf]
      %v402 = vld [vmem:[%s321 + $0x104] sm:$0xf]
      %v403 = vld [vmem:[%s321 + $0x108] sm:$0xf]
      %v404 = vld [vmem:[%s321 + $0x10c] sm:$0xf]
      %v405 = vld [vmem:[%s321 + $0x110] sm:$0xf]
      %v406 = vld [vmem:[%s321 + $0x114] sm:$0xf]
      %v407 = vld [vmem:[%s321 + $0x118] sm:$0xf]
      %v408 = vld [vmem:[%s321 + $0x11c] sm:$0xf]
      %v409 = vld [vmem:[%s321 + $0x120] sm:$0xf]
      %v410 = vld [vmem:[%s321 + $0x124] sm:$0xf]
      %v411 = vld [vmem:[%s321 + $0x128] sm:$0xf]
      %v412 = vld [vmem:[%s321 + $0x12c] sm:$0xf]
      %v413 = vld [vmem:[%s321 + $0x130] sm:$0xf]
      %v414 = vld [vmem:[%s321 + $0x134] sm:$0xf]
      %v415 = vld [vmem:[%s321 + $0x138] sm:$0xf]
      %v416 = vld [vmem:[%s321 + $0x13c] sm:$0xf]
      %v420 = vunpack.c.l.b16 %v334
      %v421 = vunpack.c.h.b16 %v334
      %v422 = vunpack.c.l.b16 %v335
      %v423 = vunpack.c.h.b16 %v335
      %v424 = vunpack.c.l.b16 %v336
      %v425 = vpack.c.b16 %v420, %v420
      %v426 = vpack.c.b16 %v421, %v421
      %v427 = vpack.c.b16 %v422, %v422
      %v428 = vpack.c.b16 %v423, %v423
      %v429 = vpack.c.b16 %v424, %v424
      %v515 = vunpack.c.l.b16 %v337
      %v516 = vunpack.c.l.b16 %v338
      %v517 = vunpack.c.l.b16 %v339
      %v518 = vunpack.c.l.b16 %v340
      %v519 = vunpack.c.l.b16 %v341
      %v520 = vunpack.c.l.b16 %v342
      %v521 = vunpack.c.l.b16 %v343
      %v522 = vunpack.c.l.b16 %v344
      %v523 = vunpack.c.l.b16 %v345
      %v524 = vunpack.c.l.b16 %v346
      %v525 = vunpack.c.l.b16 %v347
      %v526 = vunpack.c.l.b16 %v348
      %v527 = vunpack.c.l.b16 %v349
      %v528 = vunpack.c.l.b16 %v350
      %v529 = vunpack.c.l.b16 %v351
      %v530 = vunpack.c.l.b16 %v352
      %v531 = vunpack.c.l.b16 %v353
      %v532 = vunpack.c.l.b16 %v354
      %v533 = vunpack.c.l.b16 %v355
      %v534 = vunpack.c.l.b16 %v356
      %v535 = vunpack.c.l.b16 %v357
      %v536 = vunpack.c.l.b16 %v358
      %v537 = vunpack.c.l.b16 %v359
      %v538 = vunpack.c.l.b16 %v360
      %v539 = vunpack.c.l.b16 %v361
      %v540 = vunpack.c.l.b16 %v362
      %v541 = vunpack.c.l.b16 %v363
      %v542 = vunpack.c.l.b16 %v364
      %v543 = vunpack.c.l.b16 %v365
      %v544 = vunpack.c.l.b16 %v366
      %v545 = vunpack.c.l.b16 %v367
      %v546 = vunpack.c.l.b16 %v368
      %v547 = vunpack.c.l.b16 %v369
      %v548 = vunpack.c.l.b16 %v370
      %v549 = vunpack.c.l.b16 %v371
      %v550 = vunpack.c.l.b16 %v372
      %v551 = vunpack.c.l.b16 %v373
      %v552 = vunpack.c.l.b16 %v374
      %v553 = vunpack.c.l.b16 %v375
      %v554 = vunpack.c.l.b16 %v376
      %v555 = vunpack.c.l.b16 %v377
      %v556 = vunpack.c.l.b16 %v378
      %v557 = vunpack.c.l.b16 %v379
      %v558 = vunpack.c.l.b16 %v380
      %v559 = vunpack.c.l.b16 %v381
      %v560 = vunpack.c.l.b16 %v382
      %v561 = vunpack.c.l.b16 %v383
      %v562 = vunpack.c.l.b16 %v384
      %v563 = vunpack.c.l.b16 %v385
      %v564 = vunpack.c.l.b16 %v386
      %v565 = vunpack.c.l.b16 %v387
      %v566 = vunpack.c.l.b16 %v388
      %v567 = vunpack.c.l.b16 %v389
      %v568 = vunpack.c.l.b16 %v390
      %v569 = vunpack.c.l.b16 %v391
      %v570 = vunpack.c.l.b16 %v392
      %v571 = vunpack.c.l.b16 %v393
      %v572 = vunpack.c.l.b16 %v394
      %v573 = vunpack.c.l.b16 %v395
      %v574 = vunpack.c.l.b16 %v396
      %v575 = vunpack.c.l.b16 %v397
      %v576 = vunpack.c.l.b16 %v398
      %v577 = vunpack.c.l.b16 %v399
      %v578 = vunpack.c.l.b16 %v400
      %v579 = vunpack.c.l.b16 %v401
      %v580 = vunpack.c.l.b16 %v402
      %v581 = vunpack.c.l.b16 %v403
      %v582 = vunpack.c.l.b16 %v404
      %v583 = vunpack.c.l.b16 %v405
      %v584 = vunpack.c.l.b16 %v406
      %v585 = vunpack.c.l.b16 %v407
      %v586 = vunpack.c.l.b16 %v408
      %v587 = vunpack.c.l.b16 %v409
      %v588 = vunpack.c.l.b16 %v410
      %v589 = vunpack.c.l.b16 %v411
      %v590 = vunpack.c.l.b16 %v412
      %v591 = vunpack.c.l.b16 %v413
      %v592 = vunpack.c.l.b16 %v414
      %v593 = vunpack.c.l.b16 %v415
      %v594 = vunpack.c.l.b16 %v416
      %v595 = vpack.c.b16 %v516, %v515
      %v596 = vpack.c.b16 %v518, %v517
      %v597 = vpack.c.b16 %v520, %v519
      %v598 = vpack.c.b16 %v522, %v521
      %v599 = vpack.c.b16 %v524, %v523
      %v600 = vpack.c.b16 %v526, %v525
      %v601 = vpack.c.b16 %v528, %v527
      %v602 = vpack.c.b16 %v530, %v529
      %v603 = vpack.c.b16 %v532, %v531
      %v604 = vpack.c.b16 %v534, %v533
      %v605 = vpack.c.b16 %v536, %v535
      %v606 = vpack.c.b16 %v538, %v537
      %v607 = vpack.c.b16 %v540, %v539
      %v608 = vpack.c.b16 %v542, %v541
      %v609 = vpack.c.b16 %v544, %v543
      %v610 = vpack.c.b16 %v546, %v545
      %v611 = vpack.c.b16 %v548, %v547
      %v612 = vpack.c.b16 %v550, %v549
      %v613 = vpack.c.b16 %v552, %v551
      %v614 = vpack.c.b16 %v554, %v553
      %v615 = vpack.c.b16 %v556, %v555
      %v616 = vpack.c.b16 %v558, %v557
      %v617 = vpack.c.b16 %v560, %v559
      %v618 = vpack.c.b16 %v562, %v561
      %v619 = vpack.c.b16 %v564, %v563
      %v620 = vpack.c.b16 %v566, %v565
      %v621 = vpack.c.b16 %v568, %v567
      %v622 = vpack.c.b16 %v570, %v569
      %v623 = vpack.c.b16 %v572, %v571
      %v624 = vpack.c.b16 %v574, %v573
      %v625 = vpack.c.b16 %v576, %v575
      %v626 = vpack.c.b16 %v578, %v577
      %v627 = vpack.c.b16 %v580, %v579
      %v628 = vpack.c.b16 %v582, %v581
      %v629 = vpack.c.b16 %v584, %v583
      %v630 = vpack.c.b16 %v586, %v585
      %v631 = vpack.c.b16 %v588, %v587
      %v632 = vpack.c.b16 %v590, %v589
      %v633 = vpack.c.b16 %v592, %v591
      %v634 = vpack.c.b16 %v594, %v593
      %675 = vmatprep.subr.bf16.mxu0 0
      %676 = vmatpush1.bf16.msra.mxu0 %v595
      %677 = vmatprep.subr.bf16.mxu0 0
      %678 = vmatpush1.bf16.msra.mxu0 %v596
      %679 = vmatprep.subr.bf16.mxu0 0
      %680 = vmatpush1.bf16.msra.mxu0 %v597
      %681 = vmatprep.subr.bf16.mxu0 0
      %682 = vmatpush1.bf16.msra.mxu0 %v598
      %683 = vmatprep.subr.bf16.mxu0 0
      %684 = vmatpush1.bf16.msra.mxu0 %v599
      %685 = vmatprep.subr.bf16.mxu0 0
      %686 = vmatpush1.bf16.msra.mxu0 %v600
      %687 = vmatprep.subr.bf16.mxu0 0
      %688 = vmatpush1.bf16.msra.mxu0 %v601
      %689 = vmatprep.subr.bf16.mxu0 0
      %690 = vmatpush1.bf16.msra.mxu0 %v602
      %691 = vmatprep.subr.bf16.mxu0 0
      %692 = vmatpush1.bf16.msra.mxu0 %v603
      %693 = vmatprep.subr.bf16.mxu0 0
      %694 = vmatpush1.bf16.msra.mxu0 %v604
      %695 = vmatprep.subr.bf16.mxu0 0
      %696 = vmatpush1.bf16.msra.mxu0 %v605
      %697 = vmatprep.subr.bf16.mxu0 0
      %698 = vmatpush1.bf16.msra.mxu0 %v606
      %699 = vmatprep.subr.bf16.mxu0 0
      %700 = vmatpush1.bf16.msra.mxu0 %v607
      %701 = vmatprep.subr.bf16.mxu0 0
      %702 = vmatpush1.bf16.msra.mxu0 %v608
      %703 = vmatprep.subr.bf16.mxu0 0
      %704 = vmatpush1.bf16.msra.mxu0 %v609
      %705 = vmatprep.subr.bf16.mxu0 0
      %706 = vmatpush1.bf16.msra.mxu0 %v610
      %707 = vmatprep.mubr.bf16.mxu0 %v426
      %708 = vmatmul.mubr.bf16.gmra.mrb[0].mxu0 %v425
      %v709 = vpop.f32.mrb[0].mxu0
      %v710 = vadd.f32 0.0, %v709
      %v711 = vpop.f32.mrb[0].mxu0
      %v712 = vpop.f32.mrb[0].mxu0
      %v713 = vpop.f32.mrb[0].mxu0
      %714 = vdwg.mxu0
      %715 = vmatprep.subr.bf16.mxu0 0
      %716 = vmatpush1.bf16.msra.mxu0 %v611
      %717 = vmatprep.subr.bf16.mxu0 0
      %718 = vmatpush1.bf16.msra.mxu0 %v612
      %719 = vmatprep.subr.bf16.mxu0 0
      %720 = vmatpush1.bf16.msra.mxu0 %v613
      %721 = vmatprep.subr.bf16.mxu0 0
      %722 = vmatpush1.bf16.msra.mxu0 %v614
      %723 = vmatprep.subr.bf16.mxu0 0
      %724 = vmatpush1.bf16.msra.mxu0 %v615
      %725 = vmatprep.subr.bf16.mxu0 0
      %726 = vmatpush1.bf16.msra.mxu0 %v616
      %727 = vmatprep.subr.bf16.mxu0 0
      %728 = vmatpush1.bf16.msra.mxu0 %v617
      %729 = vmatprep.subr.bf16.mxu0 0
      %730 = vmatpush1.bf16.msra.mxu0 %v618
      %731 = vmatprep.subr.bf16.mxu0 0
      %732 = vmatpush1.bf16.msra.mxu0 %v619
      %733 = vmatprep.subr.bf16.mxu0 0
      %734 = vmatpush1.bf16.msra.mxu0 %v620
      %735 = vmatprep.subr.bf16.mxu0 0
      %736 = vmatpush1.bf16.msra.mxu0 %v621
      %737 = vmatprep.subr.bf16.mxu0 0
      %738 = vmatpush1.bf16.msra.mxu0 %v622
      %739 = vmatprep.subr.bf16.mxu0 0
      %740 = vmatpush1.bf16.msra.mxu0 %v623
      %741 = vmatprep.subr.bf16.mxu0 0
      %742 = vmatpush1.bf16.msra.mxu0 %v624
      %743 = vmatprep.subr.bf16.mxu0 0
      %744 = vmatpush1.bf16.msra.mxu0 %v625
      %745 = vmatprep.subr.bf16.mxu0 0
      %746 = vmatpush1.bf16.msra.mxu0 %v626
      %747 = vmatprep.mubr.bf16.mxu0 %v428
      %748 = vmatmul.mubr.bf16.gmra.mrb[0].mxu0 %v427
      %v749 = vpop.f32.mrb[0].mxu0
      %v750 = vadd.f32 %v710, %v749
      %v751 = vpop.f32.mrb[0].mxu0
      %v752 = vpop.f32.mrb[0].mxu0
      %v753 = vpop.f32.mrb[0].mxu0
      %754 = vdwg.mxu0
      %755 = vmatprep.subr.bf16.mxu0 0
      %756 = vmatpush1.bf16.msra.mxu0 %v627
      %757 = vmatprep.subr.bf16.mxu0 0
      %758 = vmatpush1.bf16.msra.mxu0 %v628
      %759 = vmatprep.subr.bf16.mxu0 0
      %760 = vmatpush1.bf16.msra.mxu0 %v629
      %761 = vmatprep.subr.bf16.mxu0 0
      %762 = vmatpush1.bf16.msra.mxu0 %v630
      %763 = vmatprep.subr.bf16.mxu0 0
      %764 = vmatpush1.bf16.msra.mxu0 %v631
      %765 = vmatprep.subr.bf16.mxu0 0
      %766 = vmatpush1.bf16.msra.mxu0 %v632
      %767 = vmatprep.subr.bf16.mxu0 0
      %768 = vmatpush1.bf16.msra.mxu0 %v633
      %769 = vmatprep.subr.bf16.mxu0 0
      %770 = vmatpush1.bf16.msra.mxu0 %v634
      %771 = vmatprep.subr.bf16.mxu0 0
      %772 = vmatpush1.bf16.msra.mxu0 0
      %773 = vmatprep.subr.bf16.mxu0 0
      %774 = vmatpush1.bf16.msra.mxu0 0
      %775 = vmatprep.subr.bf16.mxu0 0
      %776 = vmatpush1.bf16.msra.mxu0 0
      %777 = vmatprep.subr.bf16.mxu0 0
      %778 = vmatpush1.bf16.msra.mxu0 0
      %779 = vmatprep.subr.bf16.mxu0 0
      %780 = vmatpush1.bf16.msra.mxu0 0
      %781 = vmatprep.subr.bf16.mxu0 0
      %782 = vmatpush1.bf16.msra.mxu0 0
      %783 = vmatprep.subr.bf16.mxu0 0
      %784 = vmatpush1.bf16.msra.mxu0 0
      %785 = vmatprep.subr.bf16.mxu0 0
      %786 = vmatpush1.bf16.msra.mxu0 0
      %787 = vmatprep.mubr.bf16.mxu0 0
      %788 = vmatmul.mubr.bf16.gmra.mrb[0].mxu0 %v429
      %v789 = vpop.f32.mrb[0].mxu0
      %v790 = vadd.f32 %v750, %v789
      %v791 = vpop.f32.mrb[0].mxu0
      %v792 = vpop.f32.mrb[0].mxu0
      %v793 = vpop.f32.mrb[0].mxu0
      %794 = vdwg.mxu0
      %v795 = vadd.f32 %v333, %v790
      %796 = vst [vmem:[#allocation2] sm:$0xff] %v795
      %p797 = scmp.eq.s32.totalorder %s23, 4
      // Predicated region
      $region53: #{hat_forward.3} parent=47 // pred_check
        %p798 = pneg %p797
      $region54: #{hat_forward.3} parent=47 // pred_check_branch
        %800 = sbr.rel (%p798) target = $region56
      $region55: #{hat_forward.3} parent=47 // pred_region
        %v801 = vld [vmem:[#allocation2] sm:$0xff]
        %v802 = vld [vmem:[%s2] sm:$0x1]
        %v804 = vlaneseq
        %v805 = vshrl.u32 %v804, 7
        %v806 = vsub.s32 0, %v805
        %v807 = vrot.slane %v802, %v806
        %v809 = vadd.f32 %v801, %v807
        %v810 = vmax.f32 %v809, 0.0
        %v811 = vpack.c.bf16 %v810, %v810
        %v812 = vld [vmem:[%s3] sm:$0xf]
        %v813 = vld [vmem:[%s3 + $0x4] sm:$0xf]
        %v814 = vld [vmem:[%s3 + $0x8] sm:$0xf]
        %v815 = vld [vmem:[%s3 + $0xc] sm:$0xf]
        %v816 = vld [vmem:[%s3 + $0x10] sm:$0xf]
        %v817 = vld [vmem:[%s3 + $0x14] sm:$0xf]
        %v818 = vld [vmem:[%s3 + $0x18] sm:$0xf]
        %v819 = vld [vmem:[%s3 + $0x1c] sm:$0xf]
        %v820 = vld [vmem:[%s3 + $0x20] sm:$0xf]
        %v821 = vld [vmem:[%s3 + $0x24] sm:$0xf]
        %v822 = vld [vmem:[%s3 + $0x28] sm:$0xf]
        %v823 = vld [vmem:[%s3 + $0x2c] sm:$0xf]
        %v824 = vld [vmem:[%s3 + $0x30] sm:$0xf]
        %v825 = vld [vmem:[%s3 + $0x34] sm:$0xf]
        %v826 = vld [vmem:[%s3 + $0x38] sm:$0xf]
        %v827 = vld [vmem:[%s3 + $0x3c] sm:$0xf]
        %v828 = vld [vmem:[%s4] sm:$0x1]
        %v830 = vlaneseq
        %v831 = vshrl.u32 %v830, 7
        %v832 = vsub.s32 0, %v831
        %v833 = vrot.slane %v828, %v832
        %v851 = vunpack.c.l.b16 %v812
        %v852 = vunpack.c.l.b16 %v813
        %v853 = vunpack.c.l.b16 %v814
        %v854 = vunpack.c.l.b16 %v815
        %v855 = vunpack.c.l.b16 %v816
        %v856 = vunpack.c.l.b16 %v817
        %v857 = vunpack.c.l.b16 %v818
        %v858 = vunpack.c.l.b16 %v819
        %v859 = vunpack.c.l.b16 %v820
        %v860 = vunpack.c.l.b16 %v821
        %v861 = vunpack.c.l.b16 %v822
        %v862 = vunpack.c.l.b16 %v823
        %v863 = vunpack.c.l.b16 %v824
        %v864 = vunpack.c.l.b16 %v825
        %v865 = vunpack.c.l.b16 %v826
        %v866 = vunpack.c.l.b16 %v827
        %v867 = vpack.c.b16 %v852, %v851
        %v868 = vpack.c.b16 %v854, %v853
        %v869 = vpack.c.b16 %v856, %v855
        %v870 = vpack.c.b16 %v858, %v857
        %v871 = vpack.c.b16 %v860, %v859
        %v872 = vpack.c.b16 %v862, %v861
        %v873 = vpack.c.b16 %v864, %v863
        %v874 = vpack.c.b16 %v866, %v865
        %883 = vmatprep.subr.bf16.mxu0 0
        %884 = vmatpush1.bf16.msra.mxu0 %v867
        %885 = vmatprep.subr.bf16.mxu0 0
        %886 = vmatpush1.bf16.msra.mxu0 %v868
        %887 = vmatprep.subr.bf16.mxu0 0
        %888 = vmatpush1.bf16.msra.mxu0 %v869
        %889 = vmatprep.subr.bf16.mxu0 0
        %890 = vmatpush1.bf16.msra.mxu0 %v870
        %891 = vmatprep.subr.bf16.mxu0 0
        %892 = vmatpush1.bf16.msra.mxu0 %v871
        %893 = vmatprep.subr.bf16.mxu0 0
        %894 = vmatpush1.bf16.msra.mxu0 %v872
        %895 = vmatprep.subr.bf16.mxu0 0
        %896 = vmatpush1.bf16.msra.mxu0 %v873
        %897 = vmatprep.subr.bf16.mxu0 0
        %898 = vmatpush1.bf16.msra.mxu0 %v874
        %899 = vmatprep.subr.bf16.mxu0 0
        %900 = vmatpush1.bf16.msra.mxu0 0
        %901 = vmatprep.subr.bf16.mxu0 0
        %902 = vmatpush1.bf16.msra.mxu0 0
        %903 = vmatprep.subr.bf16.mxu0 0
        %904 = vmatpush1.bf16.msra.mxu0 0
        %905 = vmatprep.subr.bf16.mxu0 0
        %906 = vmatpush1.bf16.msra.mxu0 0
        %907 = vmatprep.subr.bf16.mxu0 0
        %908 = vmatpush1.bf16.msra.mxu0 0
        %909 = vmatprep.subr.bf16.mxu0 0
        %910 = vmatpush1.bf16.msra.mxu0 0
        %911 = vmatprep.subr.bf16.mxu0 0
        %912 = vmatpush1.bf16.msra.mxu0 0
        %913 = vmatprep.subr.bf16.mxu0 0
        %914 = vmatpush1.bf16.msra.mxu0 0
        %915 = vmatprep.mubr.bf16.mxu0 0
        %916 = vmatmul.mubr.bf16.gmra.mrb[0].mxu0 %v811
        %v917 = vpop.f32.mrb[0].mxu0
        %v918 = vadd.f32 %v833, %v917
        %v919 = vpop.f32.mrb[0].mxu0
        %v920 = vpop.f32.mrb[0].mxu0
        %v921 = vpop.f32.mrb[0].mxu0
        %922 = vdwg.mxu0
        %v923 = vmax.f32 %v918, 0.0
        %v924 = vpack.c.bf16 %v923, %v923
        %v925 = vld [vmem:[%s5] sm:$0xf]
        %v926 = vld [vmem:[%s5 + $0x4] sm:$0xf]
        %v927 = vld [vmem:[%s5 + $0x8] sm:$0xf]
        %v928 = vld [vmem:[%s5 + $0xc] sm:$0xf]
        %v929 = vld [vmem:[%s5 + $0x10] sm:$0xf]
        %v930 = vld [vmem:[%s5 + $0x14] sm:$0xf]
        %v931 = vld [vmem:[%s5 + $0x18] sm:$0xf]
        %v932 = vld [vmem:[%s5 + $0x1c] sm:$0xf]
        %v933 = vld [vmem:[%s5 + $0x20] sm:$0xf]
        %v934 = vld [vmem:[%s5 + $0x24] sm:$0xf]
        %v935 = vld [vmem:[%s5 + $0x28] sm:$0xf]
        %v936 = vld [vmem:[%s5 + $0x2c] sm:$0xf]
        %v937 = vld [vmem:[%s5 + $0x30] sm:$0xf]
        %v938 = vld [vmem:[%s5 + $0x34] sm:$0xf]
        %v939 = vld [vmem:[%s5 + $0x38] sm:$0xf]
        %v940 = vld [vmem:[%s5 + $0x3c] sm:$0xf]
        %v941 = vld [vmem:[%s6] sm:$0x1]
        %v943 = vlaneseq
        %v944 = vshrl.u32 %v943, 7
        %v945 = vsub.s32 0, %v944
        %v946 = vrot.slane %v941, %v945
        %v964 = vunpack.c.l.b16 %v925
        %v965 = vunpack.c.l.b16 %v926
        %v966 = vunpack.c.l.b16 %v927
        %v967 = vunpack.c.l.b16 %v928
        %v968 = vunpack.c.l.b16 %v929
        %v969 = vunpack.c.l.b16 %v930
        %v970 = vunpack.c.l.b16 %v931
        %v971 = vunpack.c.l.b16 %v932
        %v972 = vunpack.c.l.b16 %v933
        %v973 = vunpack.c.l.b16 %v934
        %v974 = vunpack.c.l.b16 %v935
        %v975 = vunpack.c.l.b16 %v936
        %v976 = vunpack.c.l.b16 %v937
        %v977 = vunpack.c.l.b16 %v938
        %v978 = vunpack.c.l.b16 %v939
        %v979 = vunpack.c.l.b16 %v940
        %v980 = vpack.c.b16 %v965, %v964
        %v981 = vpack.c.b16 %v967, %v966
        %v982 = vpack.c.b16 %v969, %v968
        %v983 = vpack.c.b16 %v971, %v970
        %v984 = vpack.c.b16 %v973, %v972
        %v985 = vpack.c.b16 %v975, %v974
        %v986 = vpack.c.b16 %v977, %v976
        %v987 = vpack.c.b16 %v979, %v978
        %996 = vmatprep.subr.bf16.mxu0 0
        %997 = vmatpush1.bf16.msra.mxu0 %v980
        %998 = vmatprep.subr.bf16.mxu0 0
        %999 = vmatpush1.bf16.msra.mxu0 %v981
        %1000 = vmatprep.subr.bf16.mxu0 0
        %1001 = vmatpush1.bf16.msra.mxu0 %v982
        %1002 = vmatprep.subr.bf16.mxu0 0
        %1003 = vmatpush1.bf16.msra.mxu0 %v983
        %1004 = vmatprep.subr.bf16.mxu0 0
        %1005 = vmatpush1.bf16.msra.mxu0 %v984
        %1006 = vmatprep.subr.bf16.mxu0 0
        %1007 = vmatpush1.bf16.msra.mxu0 %v985
        %1008 = vmatprep.subr.bf16.mxu0 0
        %1009 = vmatpush1.bf16.msra.mxu0 %v986
        %1010 = vmatprep.subr.bf16.mxu0 0
        %1011 = vmatpush1.bf16.msra.mxu0 %v987
        %1012 = vmatprep.subr.bf16.mxu0 0
        %1013 = vmatpush1.bf16.msra.mxu0 0
        %1014 = vmatprep.subr.bf16.mxu0 0
        %1015 = vmatpush1.bf16.msra.mxu0 0
        %1016 = vmatprep.subr.bf16.mxu0 0
        %1017 = vmatpush1.bf16.msra.mxu0 0
        %1018 = vmatprep.subr.bf16.mxu0 0
        %1019 = vmatpush1.bf16.msra.mxu0 0
        %1020 = vmatprep.subr.bf16.mxu0 0
        %1021 = vmatpush1.bf16.msra.mxu0 0
        %1022 = vmatprep.subr.bf16.mxu0 0
        %1023 = vmatpush1.bf16.msra.mxu0 0
        %1024 = vmatprep.subr.bf16.mxu0 0
        %1025 = vmatpush1.bf16.msra.mxu0 0
        %1026 = vmatprep.subr.bf16.mxu0 0
        %1027 = vmatpush1.bf16.msra.mxu0 0
        %1028 = vmatprep.mubr.bf16.mxu0 0
        %1029 = vmatmul.mubr.bf16.gmra.mrb[0].mxu0 %v924
        %v1030 = vpop.f32.mrb[0].mxu0
        %v1031 = vadd.f32 %v946, %v1030
        %v1032 = vpop.f32.mrb[0].mxu0
        %v1033 = vpop.f32.mrb[0].mxu0
        %v1034 = vpop.f32.mrb[0].mxu0
        %1035 = vdwg.mxu0
        %1036 = vst [vmem:[%s326] sm:$0xff] %v1031
      $region56: #{hat_forward.3} parent=47 // pred_fallthru
        _
      %p1037 = scmp.lt.s32.totalorder %s22, 0
      %s1038 = scalar_select %p1037, %s22, 0
      %s1039 = smul.addr %s1038, 8
      %s1040 = scalar_lea.vmem %s7, %s1039
      // Predicated region
      $region57: #{hat_forward.3} parent=47 // pred_check
        %p1041 = pneg %p207
      $region58: #{hat_forward.3} parent=47 // pred_check_branch
        %1043 = sbr.rel (%p1041) target = $region60
      $region59: #{hat_forward.3} parent=47 // pred_region
        _
      $region60: #{hat_forward.3} parent=47 // pred_fallthru
        _
      // Predicated region
      $region61: #{hat_forward.3} parent=47 // pred_check
        %p1044 = pneg %p207
      $region62: #{hat_forward.3} parent=47 // pred_check_branch
        %1046 = sbr.rel (%p1044) target = $region64
      $region63: #{hat_forward.3} parent=47 // pred_region
        %p1047 = scmp.lt.s32.totalorder %s22, 0
        %s1048 = scalar_select %p1047, %s22, 0
        %s1049 = smul.addr %s1048, 8
        %s1050 = scalar_lea.vmem %s7, %s1049
      $region64: #{hat_forward.3} parent=47 // pred_fallthru
        _
    $region48: #{hat_forward.3} parent=5 // pred_fallthru
      _
    %p1051 = scmp.le.s32.totalorder 2, %s13
    // Predicated region
    $region65: #{hat_forward.3} parent=5 // pred_check
      %p1052 = pneg %p1051
    $region66: #{hat_forward.3} parent=5 // pred_check_branch
      %1054 = sbr.rel (%p1052) target = $region68
    $region67: #{hat_forward.3} parent=5 // pred_region
      %s1055 = ssub.s32 %s13, 2
    $region68: #{hat_forward.3} parent=5 // pred_fallthru
      _
  $region6: #{hat_forward.3} parent=0 // loop_footer
    %s17 = sadd.s32 1, %s13
  $region7: #{hat_forward.3} parent=0 // loop_footer_branch
    %12 = sbr.rel target = $region3
  $region8: #{hat_forward.3} parent=0 // loop_exit
    _

</llo_original>
